<compile_context>
chip_gen: v7x
topology: tpu7x:2x2x1
jax: 0.10.0
libtpu: 0.0.40
codegen_flags: <defaults>
</compile_context>

<pallas_src>
import jax
import jax.numpy as jnp
from jax import lax
from jax.experimental import pallas as pl
from jax.experimental.pallas import tpu as pltpu


# ----------------------------- fused Pallas kernel -----------------------------

def _mpnn_lstm_fused_kernel(
        a_ref, xf_ref, xs_ref,
        wg1_ref, bg1_ref, wg2_ref, bg2_ref,
        wi1_ref, wh1_ref, b1_ref,
        wih2_ref, b2_ref,
        wfc1_ref, bfc1_ref, wf2_ref, bf2_ref,
        out_ref):
    f32 = jnp.float32
    W, N, _ = a_ref.shape
    H = wg1_ref.shape[1]
    H2, H3 = 2 * H, 3 * H

    a = a_ref[...]            # [W, N, N] normalized block-diagonal adjacency
    xf = xf_ref[...]          # [W*N, F]  node features (time-major, flattened)

    def gcn_bn(inp_flat, w, b):
        # one sublane-dense feature matmul for all W*N rows ...
        xw = jnp.dot(inp_flat, w, preferred_element_type=f32)            # [W*N, H]
        # ... then the per-window-block graph aggregation A_t @ (X_t W)
        ax = jnp.einsum('wij,wjh->wih', a, xw.reshape(W, N, H),
                        preferred_element_type=f32).reshape(W * N, H)
        h = jnp.maximum(ax + b, 0.0)
        # training-mode BatchNorm (gamma=1, beta=0), stats over all W*N rows
        mean = jnp.mean(h, axis=0, keepdims=True)
        var = jnp.mean((h - mean) ** 2, axis=0, keepdims=True)
        return (h - mean) * lax.rsqrt(var + 1e-5)

    h1 = gcn_bn(xf, wg1_ref[...], bg1_ref[...])        # [W*N, H]
    h2 = gcn_bn(h1, wg2_ref[...], bg2_ref[...])        # [W*N, H]

    # LSTM1 bulk (non-recurrent) input projection: one [W*N, 2H] @ [2H, 4H] matmul.
    # Gate columns are pre-reordered to (i, f, o, g) so sigmoid lanes are contiguous.
    h12 = jnp.concatenate([h1, h2], axis=1)                              # [W*N, 2H]
    xg1 = (jnp.dot(h12, wi1_ref[...], preferred_element_type=f32)
           + b1_ref[...]).reshape(W, N, 4 * H)                           # [W, N, 4H]

    wh1 = wh1_ref[...]        # [H, 4H]
    wih2 = wih2_ref[...]      # [2H, 4H] = [wi2; wh2] stacked
    b2 = b2_ref[...]          # [1, 4H]

    h1s = jnp.zeros((N, H), f32)
    c1s = jnp.zeros((N, H), f32)
    h2s = jnp.zeros((N, H), f32)
    c2s = jnp.zeros((N, H), f32)

    # Statically unrolled time loop (W is a small compile-time constant).
    # Both stacked LSTMs are interleaved; seq1 never leaves vregs.
    for t in range(W):
        # LSTM1: one 128-lane-wide gate matmul, one sigmoid(3H), one tanh(H)
        g1 = xg1[t] + jnp.dot(h1s, wh1, preferred_element_type=f32)      # [N, 4H]
        s1 = jax.nn.sigmoid(g1[:, :H3])                                  # i | f | o
        t1 = jnp.tanh(g1[:, H3:])                                        # g
        c1s = s1[:, H:H2] * c1s + s1[:, :H] * t1
        h1s = s1[:, H2:H3] * jnp.tanh(c1s)

        # LSTM2: K-concat [h1s, h2s] -> single [N, 2H] @ [2H, 4H] gate matmul
        g2 = (jnp.dot(jnp.concatenate([h1s, h2s], axis=1), wih2,
                      preferred_element_type=f32) + b2)                  # [N, 4H]
        s2 = jax.nn.sigmoid(g2[:, :H3])
        t2 = jnp.tanh(g2[:, H3:])
        c2s = s2[:, H:H2] * c2s + s2[:, :H] * t2
        h2s = s2[:, H2:H3] * jnp.tanh(c2s)

    # readout: concat([hn1, hn2, skip]) @ w_fc1 (single matmul), then padded fc2
    feat = jnp.concatenate([h1s, h2s, xs_ref[...]], axis=1)              # [N, 2H+W*F]
    y1 = jnp.maximum(jnp.dot(feat, wfc1_ref[...], preferred_element_type=f32)
                     + bfc1_ref[...], 0.0)                               # [N, H]
    y2 = jnp.maximum(jnp.dot(y1, wf2_ref[...], preferred_element_type=f32)
                     + bf2_ref[...], 0.0)                                # [N, 128]
    out_ref[...] = y2


# ----------------------------- pallas_call wrapper -----------------------------

def mpnn_lstm_fused(a_blocks, x_flat, x_skip, dp):
    W, N, _ = a_blocks.shape
    F = x_flat.shape[1]
    H = dp['wg1'].shape[1]
    out_pad = dp['wf2'].shape[1]

    args = (a_blocks, x_flat, x_skip,
            dp['wg1'], dp['bg1'], dp['wg2'], dp['bg2'],
            dp['wi1'], dp['wh1'], dp['b1'],
            dp['wih2'], dp['b2'],
            dp['wfc1'], dp['bfc1'], dp['wf2'], dp['bf2'])

    bytes_in = sum(int(a.size) * a.dtype.itemsize for a in args)
    bytes_out = N * out_pad * 4
    footprint = bytes_in + bytes_out
    vmem_limit = int(min(64 * 1024 * 1024, max(16 * 1024 * 1024, 4 * footprint)))

    flops = 2 * (W * N * F * H            # gcn1 feature matmul
                 + 2 * W * N * N * H      # A @ XW (both gcn layers)
                 + W * N * H * H          # gcn2 feature matmul
                 + W * N * 2 * H * 4 * H  # lstm1 bulk input projection
                 + W * N * H * 4 * H      # lstm1 recurrent matmuls
                 + W * N * 2 * H * 4 * H  # lstm2 fused matmuls
                 + N * (2 * H + W * F) * H
                 + N * H * out_pad)
    transcendentals = 2 * W * N * 5 * H   # sigmoid(3H)+2*tanh(H) per LSTM per step

    vmem = lambda: pl.BlockSpec(memory_space=pltpu.MemorySpace.VMEM)
    return pl.pallas_call(
        _mpnn_lstm_fused_kernel,
        out_shape=jax.ShapeDtypeStruct((N, out_pad), jnp.float32),
        in_specs=[vmem() for _ in args],
        out_specs=vmem(),
        compiler_params=pltpu.CompilerParams(vmem_limit_bytes=vmem_limit),
        cost_estimate=pl.CostEstimate(flops=flops,
                                      transcendentals=transcendentals,
                                      bytes_accessed=footprint),
    )(*args)


# ----------------------------- glue: graph & weight preprocessing -----------------------------

def build_adj_blocks(edge_index, edge_attr, window, n_nodes):
    """GCN-normalized per-window adjacency blocks [W, N, N] (with self loops).

    Assumes the batched graph is block-diagonal across window steps (PyG-style
    per-day graphs replicated over the window), which is how MPNN_LSTM batches it.
    TODO(synk): cross-block edges are silently folded into the src block.
    """
    src, dst = edge_index[0], edge_index[1]
    blk = src // n_nodes
    ls = src % n_nodes
    ld = dst % n_nodes
    a = jnp.zeros((window, n_nodes, n_nodes), jnp.float32).at[blk, ld, ls].add(
        edge_attr.astype(jnp.float32))
    a = a + jnp.eye(n_nodes, dtype=jnp.float32)[None]
    deg = jnp.sum(a, axis=2)
    dinv = jnp.where(deg > 0, lax.rsqrt(deg), 0.0)
    return dinv[:, :, None] * a * dinv[:, None, :]


def derive_params(p, *, window, nfeat, nhid, out_pad=128):
    """One-time weight preprocessing (cached on the Wrapper):
    - reorder LSTM gate columns (i,f,g,o) -> (i,f,o,g) so sigmoid lanes are contiguous
    - stack LSTM2 input+recurrent weights into a single [2H, 4H] matrix
    - zero-pad fc2 to 128 output lanes for a lane-dense final store
    """
    H = nhid
    f32 = jnp.float32

    def reorder(w):   # columns (i,f,g,o) -> (i,f,o,g) along the last (4H) axis
        return jnp.concatenate([w[..., :2 * H], w[..., 3 * H:], w[..., 2 * H:3 * H]],
                               axis=-1)

    nout = p['w_fc2'].shape[1]
    wf2p = jnp.zeros((H, out_pad), f32).at[:, :nout].set(p['w_fc2'].astype(f32))
    bf2p = jnp.zeros((1, out_pad), f32).at[:, :nout].set(p['b_fc2'].astype(f32))

    return {
        'wg1': p['w_g1'].astype(f32),
        'bg1': p['b_g1'].astype(f32),
        'wg2': p['w_g2'].astype(f32),
        'bg2': p['b_g2'].astype(f32),
        'wi1': reorder(p['wi1'].astype(f32)),                       # [2H, 4H]
        'wh1': reorder(p['wh1'].astype(f32)),                       # [H, 4H]
        'b1': reorder(p['b1'].astype(f32)),                         # [1, 4H]
        'wih2': reorder(jnp.concatenate([p['wi2'], p['wh2']], axis=0).astype(f32)),
        'b2': reorder(p['b2'].astype(f32)),                         # [1, 4H]
        'wfc1': p['w_fc1'].astype(f32),                             # [2H+W*F, H]
        'bfc1': p['b_fc1'].astype(f32),                             # [1, H]
        'wf2': wf2p,                                                # [H, 128]
        'bf2': bf2p,                                                # [1, 128]
        'nout': nout,
    }


# ----------------------------- Wrapper (mirrors the PyTorch module) -----------------------------

class Config:
    def __init__(self, abl_type='mpnn_lstm'):
        self.abl_type = abl_type


class Wrapper:
    def __init__(self, conf, params, *, window, n_nodes, nfeat, nhid):
        self.config = conf
        if self.config.abl_type not in ('lstm', 'mpnn_lstm'):
            raise ValueError('Unexpected Model Type')
        self.params = params
        self.window, self.n_nodes, self.nfeat, self.nhid = window, n_nodes, nfeat, nhid
        # one-time weight preprocessing (gate reorder / stacking / fc2 lane padding)
        self._dp = derive_params(params, window=window, nfeat=nfeat, nhid=nhid)

    def forward(self, input_days, g):
        if self.config.abl_type != 'mpnn_lstm':
            raise ValueError('Unexpected Model Type')
        a_blocks = build_adj_blocks(g['edge_index'], g['edge_attr'],
                                    self.window, self.n_nodes)
        x = input_days.astype(jnp.float32)
        W, N, F = self.window, self.n_nodes, self.nfeat
        x_flat = x.reshape(W * N, F)
        x_skip = x.reshape(W, N, F).transpose(1, 0, 2).reshape(N, W * F)
        y = mpnn_lstm_fused(a_blocks, x_flat, x_skip, self._dp)   # [N, 128]
        return y[:, 0]


# ----------------------------- pure-JAX reference (original dense semantics) -----------------------------

def _reference_forward(x, edge_index, edge_attr, p, *, window, n_nodes, nfeat, nhid):
    wn = window * n_nodes
    src, dst = edge_index[0], edge_index[1]
    a = jnp.zeros((wn, wn), jnp.float32).at[dst, src].add(edge_attr)
    a = a + jnp.eye(wn, dtype=jnp.float32)
    deg = jnp.sum(a, axis=1)
    dinv = jnp.where(deg > 0, lax.rsqrt(deg), 0.0)
    a = dinv[:, None] * a * dinv[None, :]

    def gcn_bn(inp, w, b):
        h = jnp.maximum(a @ (inp @ w) + b, 0.0)
        mean = jnp.mean(h, axis=0, keepdims=True)
        var = jnp.mean((h - mean) ** 2, axis=0, keepdims=True)
        return (h - mean) * lax.rsqrt(var + 1e-5)

    h1 = gcn_bn(x, p['w_g1'], p['b_g1'])
    h2 = gcn_bn(h1, p['w_g2'], p['b_g2'])
    h = jnp.concatenate([h1, h2], axis=1).reshape(window, n_nodes, 2 * nhid)

    def lstm(xs, wi, wh, b):
        T, N, _ = xs.shape
        def step(carry, xt):
            hp, cp = carry
            gates = xt @ wi + hp @ wh + b
            i = jax.nn.sigmoid(gates[:, 0 * nhid:1 * nhid])
            f = jax.nn.sigmoid(gates[:, 1 * nhid:2 * nhid])
            g = jnp.tanh(gates[:, 2 * nhid:3 * nhid])
            o = jax.nn.sigmoid(gates[:, 3 * nhid:4 * nhid])
            c = f * cp + i * g
            hh = o * jnp.tanh(c)
            return (hh, c), hh
        (hn, _), seq = lax.scan(step, (jnp.zeros((N, nhid)), jnp.zeros((N, nhid))), xs)
        return seq, hn

    seq1, hn1 = lstm(h, p['wi1'], p['wh1'], p['b1'])
    _, hn2 = lstm(seq1, p['wi2'], p['wh2'], p['b2'])
    skip = x.reshape(window, n_nodes, nfeat).transpose(1, 0, 2).reshape(n_nodes, window * nfeat)
    feat = jnp.concatenate([hn1, hn2, skip], axis=1)
    y = jnp.maximum(feat @ p['w_fc1'] + p['b_fc1'], 0.0)
    y = jnp.maximum(y @ p['w_fc2'] + p['b_fc2'], 0.0)
    return y[:, 0]


# ----------------------------- deterministic setup & run -----------------------------

def init_params(key, *, window, nfeat, nhid, nout):
    ks = jax.random.split(key, 8)
    s = 0.1
    return {
        'w_g1': s * jax.random.normal(ks[0], (nfeat, nhid), jnp.float32),
        'b_g1': jnp.zeros((1, nhid), jnp.float32),
        'w_g2': s * jax.random.normal(ks[1], (nhid, nhid), jnp.float32),
        'b_g2': jnp.zeros((1, nhid), jnp.float32),
        'wi1': s * jax.random.normal(ks[2], (2 * nhid, 4 * nhid), jnp.float32),
        'wh1': s * jax.random.normal(ks[3], (nhid, 4 * nhid), jnp.float32),
        'b1': jnp.zeros((1, 4 * nhid), jnp.float32),
        'wi2': s * jax.random.normal(ks[4], (nhid, 4 * nhid), jnp.float32),
        'wh2': s * jax.random.normal(ks[5], (nhid, 4 * nhid), jnp.float32),
        'b2': jnp.zeros((1, 4 * nhid), jnp.float32),
        'w_fc1': s * jax.random.normal(ks[6], (2 * nhid + window * nfeat, nhid), jnp.float32),
        'b_fc1': jnp.zeros((1, nhid), jnp.float32),
        'w_fc2': s * jax.random.normal(ks[7], (nhid, nout), jnp.float32),
        'b_fc2': jnp.zeros((1, nout), jnp.float32),
    }


if __name__ == "__main__":
    N_NODES, WINDOW, NFEAT, NHID, NOUT = 8, 4, 4, 32, 1
    WN = WINDOW * N_NODES

    key = jax.random.PRNGKey(0)
    k_x, k_w, k_p = jax.random.split(key, 3)

    # input node features: [window * n_nodes, nfeat]
    x = jax.random.normal(k_x, (WN, NFEAT), jnp.float32)

    # ring graph per time step, replicated block-diagonally across the window
    base_src = jnp.arange(N_NODES)
    base_dst = (base_src + 1) % N_NODES
    bs = jnp.concatenate([base_src, base_dst])
    bd = jnp.concatenate([base_dst, base_src])
    offs = (jnp.arange(WINDOW) * N_NODES)[:, None]
    src = (bs[None, :] + offs).reshape(-1)
    dst = (bd[None, :] + offs).reshape(-1)
    edge_index = jnp.stack([src, dst], axis=0).astype(jnp.int32)
    edge_attr = jax.random.uniform(k_w, (edge_index.shape[1],), jnp.float32, 0.1, 1.0)
    g = {'edge_index': edge_index, 'edge_attr': edge_attr}

    params = init_params(k_p, window=WINDOW, nfeat=NFEAT, nhid=NHID, nout=NOUT)

    model = Wrapper(Config('mpnn_lstm'), params,
                    window=WINDOW, n_nodes=N_NODES, nfeat=NFEAT, nhid=NHID)
    out = model.forward(x, g)
    out = jax.block_until_ready(out)
    assert out.shape == (N_NODES,)

    # correctness check against the original dense-adjacency / concat semantics
    ref = _reference_forward(x, edge_index, edge_attr, params,
                             window=WINDOW, n_nodes=N_NODES, nfeat=NFEAT, nhid=NHID)
    ref = jax.block_until_ready(ref)
    max_err = float(jnp.max(jnp.abs(out - ref)))
    if max_err > 2e-3:
        raise AssertionError(f"fused kernel mismatch vs reference, max|diff|={max_err}")

    print("KERNEL_OK")
</pallas_src>

<mosaic_0001>
module attributes {stable_mosaic.version = 11 : i64} {
  func.func @_mpnn_lstm_fused_kernel(%arg0: memref<4x8x8xf32, #tpu.memory_space<vmem>>, %arg1: memref<32x4xf32, #tpu.memory_space<vmem>>, %arg2: memref<8x16xf32, #tpu.memory_space<vmem>>, %arg3: memref<4x32xf32, #tpu.memory_space<vmem>>, %arg4: memref<1x32xf32, #tpu.memory_space<vmem>>, %arg5: memref<32x32xf32, #tpu.memory_space<vmem>>, %arg6: memref<1x32xf32, #tpu.memory_space<vmem>>, %arg7: memref<64x128xf32, #tpu.memory_space<vmem>>, %arg8: memref<32x128xf32, #tpu.memory_space<vmem>>, %arg9: memref<1x128xf32, #tpu.memory_space<vmem>>, %arg10: memref<64x128xf32, #tpu.memory_space<vmem>>, %arg11: memref<1x128xf32, #tpu.memory_space<vmem>>, %arg12: memref<80x32xf32, #tpu.memory_space<vmem>>, %arg13: memref<1x32xf32, #tpu.memory_space<vmem>>, %arg14: memref<32x128xf32, #tpu.memory_space<vmem>>, %arg15: memref<1x128xf32, #tpu.memory_space<vmem>>, %arg16: memref<8x128xf32, #tpu.memory_space<vmem>>) attributes {dimension_semantics = [], scalar_prefetch = 0 : i64, scratch_operands = 0 : i64, tpu.core_type = #tpu.core_type<tc>} {
    %c0 = arith.constant 0 : index
    %c0_0 = arith.constant 0 : index
    %c0_1 = arith.constant 0 : index
    %0 = vector.load %arg0[%c0, %c0_0, %c0_1] : memref<4x8x8xf32, #tpu.memory_space<vmem>>, vector<4x8x8xf32>
    %c0_2 = arith.constant 0 : index
    %c0_3 = arith.constant 0 : index
    %1 = vector.load %arg1[%c0_2, %c0_3] : memref<32x4xf32, #tpu.memory_space<vmem>>, vector<32x4xf32>
    %c0_4 = arith.constant 0 : index
    %c0_5 = arith.constant 0 : index
    %2 = vector.load %arg3[%c0_4, %c0_5] : memref<4x32xf32, #tpu.memory_space<vmem>>, vector<4x32xf32>
    %c0_6 = arith.constant 0 : index
    %c0_7 = arith.constant 0 : index
    %3 = vector.load %arg4[%c0_6, %c0_7] : memref<1x32xf32, #tpu.memory_space<vmem>>, vector<1x32xf32>
    %cst = arith.constant dense<0.000000e+00> : vector<32x32xf32>
    %4 = tpu.matmul %1, %2, %cst {dimension_numbers = #tpu.dot_dimension_numbers<[1], [0], [0], [1], [0, 0, 1, 1], [], []>} : vector<32x4xf32>, vector<4x32xf32>, vector<32x32xf32> -> vector<32x32xf32>
    %5 = vector.shape_cast %4 : vector<32x32xf32> to vector<4x8x32xf32>
    "tpu.trace_start"() <{level = 10 : i32, message = "wij,wjh->wih"}> : () -> ()
    %cst_8 = arith.constant dense<0.000000e+00> : vector<4x8x32xf32>
    %6 = tpu.matmul %0, %5, %cst_8 {dimension_numbers = #tpu.dot_dimension_numbers<[2], [1], [1], [2], [0, 0, 0, 1, 1, 2], [0], [0]>} : vector<4x8x8xf32>, vector<4x8x32xf32>, vector<4x8x32xf32> -> vector<4x8x32xf32>
    "tpu.trace_stop"() : () -> ()
    %7 = vector.shape_cast %6 : vector<4x8x32xf32> to vector<32x32xf32>
    %8 = vector.broadcast %3 : vector<1x32xf32> to vector<32x32xf32>
    %9 = arith.addf %7, %8 : vector<32x32xf32>
    %cst_9 = arith.constant 0.000000e+00 : f32
    %10 = vector.broadcast %cst_9 : f32 to vector<32x32xf32>
    %11 = arith.maximumf %9, %10 : vector<32x32xf32>
    %cst_10 = arith.constant dense<0.000000e+00> : vector<32xf32>
    %12 = vector.multi_reduction <add>, %11, %cst_10 [0] : vector<32x32xf32> to vector<32xf32>
    %13 = vector.shape_cast %12 : vector<32xf32> to vector<1x32xf32>
    %cst_11 = arith.constant 3.200000e+01 : f32
    %14 = vector.broadcast %cst_11 : f32 to vector<1x32xf32>
    %15 = arith.divf %13, %14 : vector<1x32xf32>
    %16 = vector.broadcast %15 : vector<1x32xf32> to vector<32x32xf32>
    %17 = arith.subf %11, %16 : vector<32x32xf32>
    %18 = arith.mulf %17, %17 : vector<32x32xf32>
    %cst_12 = arith.constant dense<0.000000e+00> : vector<32xf32>
    %19 = vector.multi_reduction <add>, %18, %cst_12 [0] : vector<32x32xf32> to vector<32xf32>
    %20 = vector.shape_cast %19 : vector<32xf32> to vector<1x32xf32>
    %cst_13 = arith.constant 3.200000e+01 : f32
    %21 = vector.broadcast %cst_13 : f32 to vector<1x32xf32>
    %22 = arith.divf %20, %21 : vector<1x32xf32>
    %23 = vector.broadcast %15 : vector<1x32xf32> to vector<32x32xf32>
    %24 = arith.subf %11, %23 : vector<32x32xf32>
    %cst_14 = arith.constant 9.99999974E-6 : f32
    %25 = vector.broadcast %cst_14 : f32 to vector<1x32xf32>
    %26 = arith.addf %22, %25 : vector<1x32xf32>
    %27 = math.rsqrt %26 : vector<1x32xf32>
    %28 = vector.broadcast %27 : vector<1x32xf32> to vector<32x32xf32>
    %29 = arith.mulf %24, %28 : vector<32x32xf32>
    %c0_15 = arith.constant 0 : index
    %c0_16 = arith.constant 0 : index
    %30 = vector.load %arg5[%c0_15, %c0_16] : memref<32x32xf32, #tpu.memory_space<vmem>>, vector<32x32xf32>
    %c0_17 = arith.constant 0 : index
    %c0_18 = arith.constant 0 : index
    %31 = vector.load %arg6[%c0_17, %c0_18] : memref<1x32xf32, #tpu.memory_space<vmem>>, vector<1x32xf32>
    %cst_19 = arith.constant dense<0.000000e+00> : vector<32x32xf32>
    %32 = tpu.matmul %29, %30, %cst_19 {dimension_numbers = #tpu.dot_dimension_numbers<[1], [0], [0], [1], [0, 0, 1, 1], [], []>} : vector<32x32xf32>, vector<32x32xf32>, vector<32x32xf32> -> vector<32x32xf32>
    %33 = vector.shape_cast %32 : vector<32x32xf32> to vector<4x8x32xf32>
    "tpu.trace_start"() <{level = 10 : i32, message = "wij,wjh->wih"}> : () -> ()
    %cst_20 = arith.constant dense<0.000000e+00> : vector<4x8x32xf32>
    %34 = tpu.matmul %0, %33, %cst_20 {dimension_numbers = #tpu.dot_dimension_numbers<[2], [1], [1], [2], [0, 0, 0, 1, 1, 2], [0], [0]>} : vector<4x8x8xf32>, vector<4x8x32xf32>, vector<4x8x32xf32> -> vector<4x8x32xf32>
    "tpu.trace_stop"() : () -> ()
    %35 = vector.shape_cast %34 : vector<4x8x32xf32> to vector<32x32xf32>
    %36 = vector.broadcast %31 : vector<1x32xf32> to vector<32x32xf32>
    %37 = arith.addf %35, %36 : vector<32x32xf32>
    %cst_21 = arith.constant 0.000000e+00 : f32
    %38 = vector.broadcast %cst_21 : f32 to vector<32x32xf32>
    %39 = arith.maximumf %37, %38 : vector<32x32xf32>
    %cst_22 = arith.constant dense<0.000000e+00> : vector<32xf32>
    %40 = vector.multi_reduction <add>, %39, %cst_22 [0] : vector<32x32xf32> to vector<32xf32>
    %41 = vector.shape_cast %40 : vector<32xf32> to vector<1x32xf32>
    %cst_23 = arith.constant 3.200000e+01 : f32
    %42 = vector.broadcast %cst_23 : f32 to vector<1x32xf32>
    %43 = arith.divf %41, %42 : vector<1x32xf32>
    %44 = vector.broadcast %43 : vector<1x32xf32> to vector<32x32xf32>
    %45 = arith.subf %39, %44 : vector<32x32xf32>
    %46 = arith.mulf %45, %45 : vector<32x32xf32>
    %cst_24 = arith.constant dense<0.000000e+00> : vector<32xf32>
    %47 = vector.multi_reduction <add>, %46, %cst_24 [0] : vector<32x32xf32> to vector<32xf32>
    %48 = vector.shape_cast %47 : vector<32xf32> to vector<1x32xf32>
    %cst_25 = arith.constant 3.200000e+01 : f32
    %49 = vector.broadcast %cst_25 : f32 to vector<1x32xf32>
    %50 = arith.divf %48, %49 : vector<1x32xf32>
    %51 = vector.broadcast %43 : vector<1x32xf32> to vector<32x32xf32>
    %52 = arith.subf %39, %51 : vector<32x32xf32>
    %cst_26 = arith.constant 9.99999974E-6 : f32
    %53 = vector.broadcast %cst_26 : f32 to vector<1x32xf32>
    %54 = arith.addf %50, %53 : vector<1x32xf32>
    %55 = math.rsqrt %54 : vector<1x32xf32>
    %56 = vector.broadcast %55 : vector<1x32xf32> to vector<32x32xf32>
    %57 = arith.mulf %52, %56 : vector<32x32xf32>
    %58 = tpu.concatenate %29, %57 in 1 : vector<32x32xf32>, vector<32x32xf32> -> vector<32x64xf32>
    %c0_27 = arith.constant 0 : index
    %c0_28 = arith.constant 0 : index
    %59 = vector.load %arg7[%c0_27, %c0_28] : memref<64x128xf32, #tpu.memory_space<vmem>>, vector<64x128xf32>
    %cst_29 = arith.constant dense<0.000000e+00> : vector<32x128xf32>
    %60 = tpu.matmul %58, %59, %cst_29 {dimension_numbers = #tpu.dot_dimension_numbers<[1], [0], [0], [1], [0, 0, 1, 1], [], []>} : vector<32x64xf32>, vector<64x128xf32>, vector<32x128xf32> -> vector<32x128xf32>
    %c0_30 = arith.constant 0 : index
    %c0_31 = arith.constant 0 : index
    %61 = vector.load %arg9[%c0_30, %c0_31] : memref<1x128xf32, #tpu.memory_space<vmem>>, vector<1x128xf32>
    %62 = vector.broadcast %61 : vector<1x128xf32> to vector<32x128xf32>
    %63 = arith.addf %60, %62 : vector<32x128xf32>
    %64 = vector.shape_cast %63 : vector<32x128xf32> to vector<4x8x128xf32>
    %c0_32 = arith.constant 0 : index
    %c0_33 = arith.constant 0 : index
    %65 = vector.load %arg8[%c0_32, %c0_33] : memref<32x128xf32, #tpu.memory_space<vmem>>, vector<32x128xf32>
    %c0_34 = arith.constant 0 : index
    %c0_35 = arith.constant 0 : index
    %66 = vector.load %arg10[%c0_34, %c0_35] : memref<64x128xf32, #tpu.memory_space<vmem>>, vector<64x128xf32>
    %c0_36 = arith.constant 0 : index
    %c0_37 = arith.constant 0 : index
    %67 = vector.load %arg11[%c0_36, %c0_37] : memref<1x128xf32, #tpu.memory_space<vmem>>, vector<1x128xf32>
    %cst_38 = arith.constant 0.000000e+00 : f32
    %68 = vector.broadcast %cst_38 : f32 to vector<8x32xf32>
    %cst_39 = arith.constant 0.000000e+00 : f32
    %69 = vector.broadcast %cst_39 : f32 to vector<8x32xf32>
    %cst_40 = arith.constant 0.000000e+00 : f32
    %70 = vector.broadcast %cst_40 : f32 to vector<8x32xf32>
    %cst_41 = arith.constant 0.000000e+00 : f32
    %71 = vector.broadcast %cst_41 : f32 to vector<8x32xf32>
    %72 = vector.extract_strided_slice %64 {offsets = [0, 0, 0], sizes = [1, 8, 128], strides = [1, 1, 1]} : vector<4x8x128xf32> to vector<1x8x128xf32>
    %73 = vector.shape_cast %72 : vector<1x8x128xf32> to vector<8x128xf32>
    %cst_42 = arith.constant dense<0.000000e+00> : vector<8x128xf32>
    %74 = tpu.matmul %68, %65, %cst_42 {dimension_numbers = #tpu.dot_dimension_numbers<[1], [0], [0], [1], [0, 0, 1, 1], [], []>} : vector<8x32xf32>, vector<32x128xf32>, vector<8x128xf32> -> vector<8x128xf32>
    %75 = arith.addf %73, %74 : vector<8x128xf32>
    %76 = vector.extract_strided_slice %75 {offsets = [0, 0], sizes = [8, 96], strides = [1, 1]} : vector<8x128xf32> to vector<8x96xf32>
    %77 = arith.negf %76 : vector<8x96xf32>
    %78 = math.exp %77 : vector<8x96xf32>
    %cst_43 = arith.constant 1.000000e+00 : f32
    %79 = vector.broadcast %cst_43 : f32 to vector<8x96xf32>
    %80 = arith.addf %79, %78 : vector<8x96xf32>
    %81 = arith.divf %79, %80 : vector<8x96xf32>
    %82 = vector.extract_strided_slice %75 {offsets = [0, 96], sizes = [8, 32], strides = [1, 1]} : vector<8x128xf32> to vector<8x32xf32>
    %83 = math.tanh %82 : vector<8x32xf32>
    %84 = vector.extract_strided_slice %81 {offsets = [0, 32], sizes = [8, 32], strides = [1, 1]} : vector<8x96xf32> to vector<8x32xf32>
    %85 = arith.mulf %84, %69 : vector<8x32xf32>
    %86 = vector.extract_strided_slice %81 {offsets = [0, 0], sizes = [8, 32], strides = [1, 1]} : vector<8x96xf32> to vector<8x32xf32>
    %87 = arith.mulf %86, %83 : vector<8x32xf32>
    %88 = arith.addf %85, %87 : vector<8x32xf32>
    %89 = vector.extract_strided_slice %81 {offsets = [0, 64], sizes = [8, 32], strides = [1, 1]} : vector<8x96xf32> to vector<8x32xf32>
    %90 = math.tanh %88 : vector<8x32xf32>
    %91 = arith.mulf %89, %90 : vector<8x32xf32>
    %92 = tpu.concatenate %91, %70 in 1 : vector<8x32xf32>, vector<8x32xf32> -> vector<8x64xf32>
    %cst_44 = arith.constant dense<0.000000e+00> : vector<8x128xf32>
    %93 = tpu.matmul %92, %66, %cst_44 {dimension_numbers = #tpu.dot_dimension_numbers<[1], [0], [0], [1], [0, 0, 1, 1], [], []>} : vector<8x64xf32>, vector<64x128xf32>, vector<8x128xf32> -> vector<8x128xf32>
    %94 = vector.broadcast %67 : vector<1x128xf32> to vector<8x128xf32>
    %95 = arith.addf %93, %94 : vector<8x128xf32>
    %96 = vector.extract_strided_slice %95 {offsets = [0, 0], sizes = [8, 96], strides = [1, 1]} : vector<8x128xf32> to vector<8x96xf32>
    %97 = arith.negf %96 : vector<8x96xf32>
    %98 = math.exp %97 : vector<8x96xf32>
    %cst_45 = arith.constant 1.000000e+00 : f32
    %99 = vector.broadcast %cst_45 : f32 to vector<8x96xf32>
    %100 = arith.addf %99, %98 : vector<8x96xf32>
    %101 = arith.divf %99, %100 : vector<8x96xf32>
    %102 = vector.extract_strided_slice %95 {offsets = [0, 96], sizes = [8, 32], strides = [1, 1]} : vector<8x128xf32> to vector<8x32xf32>
    %103 = math.tanh %102 : vector<8x32xf32>
    %104 = vector.extract_strided_slice %101 {offsets = [0, 32], sizes = [8, 32], strides = [1, 1]} : vector<8x96xf32> to vector<8x32xf32>
    %105 = arith.mulf %104, %71 : vector<8x32xf32>
    %106 = vector.extract_strided_slice %101 {offsets = [0, 0], sizes = [8, 32], strides = [1, 1]} : vector<8x96xf32> to vector<8x32xf32>
    %107 = arith.mulf %106, %103 : vector<8x32xf32>
    %108 = arith.addf %105, %107 : vector<8x32xf32>
    %109 = vector.extract_strided_slice %101 {offsets = [0, 64], sizes = [8, 32], strides = [1, 1]} : vector<8x96xf32> to vector<8x32xf32>
    %110 = math.tanh %108 : vector<8x32xf32>
    %111 = arith.mulf %109, %110 : vector<8x32xf32>
    %112 = vector.extract_strided_slice %64 {offsets = [1, 0, 0], sizes = [1, 8, 128], strides = [1, 1, 1]} : vector<4x8x128xf32> to vector<1x8x128xf32>
    %113 = vector.shape_cast %112 : vector<1x8x128xf32> to vector<8x128xf32>
    %cst_46 = arith.constant dense<0.000000e+00> : vector<8x128xf32>
    %114 = tpu.matmul %91, %65, %cst_46 {dimension_numbers = #tpu.dot_dimension_numbers<[1], [0], [0], [1], [0, 0, 1, 1], [], []>} : vector<8x32xf32>, vector<32x128xf32>, vector<8x128xf32> -> vector<8x128xf32>
    %115 = arith.addf %113, %114 : vector<8x128xf32>
    %116 = vector.extract_strided_slice %115 {offsets = [0, 0], sizes = [8, 96], strides = [1, 1]} : vector<8x128xf32> to vector<8x96xf32>
    %117 = arith.negf %116 : vector<8x96xf32>
    %118 = math.exp %117 : vector<8x96xf32>
    %cst_47 = arith.constant 1.000000e+00 : f32
    %119 = vector.broadcast %cst_47 : f32 to vector<8x96xf32>
    %120 = arith.addf %119, %118 : vector<8x96xf32>
    %121 = arith.divf %119, %120 : vector<8x96xf32>
    %122 = vector.extract_strided_slice %115 {offsets = [0, 96], sizes = [8, 32], strides = [1, 1]} : vector<8x128xf32> to vector<8x32xf32>
    %123 = math.tanh %122 : vector<8x32xf32>
    %124 = vector.extract_strided_slice %121 {offsets = [0, 32], sizes = [8, 32], strides = [1, 1]} : vector<8x96xf32> to vector<8x32xf32>
    %125 = arith.mulf %124, %88 : vector<8x32xf32>
    %126 = vector.extract_strided_slice %121 {offsets = [0, 0], sizes = [8, 32], strides = [1, 1]} : vector<8x96xf32> to vector<8x32xf32>
    %127 = arith.mulf %126, %123 : vector<8x32xf32>
    %128 = arith.addf %125, %127 : vector<8x32xf32>
    %129 = vector.extract_strided_slice %121 {offsets = [0, 64], sizes = [8, 32], strides = [1, 1]} : vector<8x96xf32> to vector<8x32xf32>
    %130 = math.tanh %128 : vector<8x32xf32>
    %131 = arith.mulf %129, %130 : vector<8x32xf32>
    %132 = tpu.concatenate %131, %111 in 1 : vector<8x32xf32>, vector<8x32xf32> -> vector<8x64xf32>
    %cst_48 = arith.constant dense<0.000000e+00> : vector<8x128xf32>
    %133 = tpu.matmul %132, %66, %cst_48 {dimension_numbers = #tpu.dot_dimension_numbers<[1], [0], [0], [1], [0, 0, 1, 1], [], []>} : vector<8x64xf32>, vector<64x128xf32>, vector<8x128xf32> -> vector<8x128xf32>
    %134 = vector.broadcast %67 : vector<1x128xf32> to vector<8x128xf32>
    %135 = arith.addf %133, %134 : vector<8x128xf32>
    %136 = vector.extract_strided_slice %135 {offsets = [0, 0], sizes = [8, 96], strides = [1, 1]} : vector<8x128xf32> to vector<8x96xf32>
    %137 = arith.negf %136 : vector<8x96xf32>
    %138 = math.exp %137 : vector<8x96xf32>
    %cst_49 = arith.constant 1.000000e+00 : f32
    %139 = vector.broadcast %cst_49 : f32 to vector<8x96xf32>
    %140 = arith.addf %139, %138 : vector<8x96xf32>
    %141 = arith.divf %139, %140 : vector<8x96xf32>
    %142 = vector.extract_strided_slice %135 {offsets = [0, 96], sizes = [8, 32], strides = [1, 1]} : vector<8x128xf32> to vector<8x32xf32>
    %143 = math.tanh %142 : vector<8x32xf32>
    %144 = vector.extract_strided_slice %141 {offsets = [0, 32], sizes = [8, 32], strides = [1, 1]} : vector<8x96xf32> to vector<8x32xf32>
    %145 = arith.mulf %144, %108 : vector<8x32xf32>
    %146 = vector.extract_strided_slice %141 {offsets = [0, 0], sizes = [8, 32], strides = [1, 1]} : vector<8x96xf32> to vector<8x32xf32>
    %147 = arith.mulf %146, %143 : vector<8x32xf32>
    %148 = arith.addf %145, %147 : vector<8x32xf32>
    %149 = vector.extract_strided_slice %141 {offsets = [0, 64], sizes = [8, 32], strides = [1, 1]} : vector<8x96xf32> to vector<8x32xf32>
    %150 = math.tanh %148 : vector<8x32xf32>
    %151 = arith.mulf %149, %150 : vector<8x32xf32>
    %152 = vector.extract_strided_slice %64 {offsets = [2, 0, 0], sizes = [1, 8, 128], strides = [1, 1, 1]} : vector<4x8x128xf32> to vector<1x8x128xf32>
    %153 = vector.shape_cast %152 : vector<1x8x128xf32> to vector<8x128xf32>
    %cst_50 = arith.constant dense<0.000000e+00> : vector<8x128xf32>
    %154 = tpu.matmul %131, %65, %cst_50 {dimension_numbers = #tpu.dot_dimension_numbers<[1], [0], [0], [1], [0, 0, 1, 1], [], []>} : vector<8x32xf32>, vector<32x128xf32>, vector<8x128xf32> -> vector<8x128xf32>
    %155 = arith.addf %153, %154 : vector<8x128xf32>
    %156 = vector.extract_strided_slice %155 {offsets = [0, 0], sizes = [8, 96], strides = [1, 1]} : vector<8x128xf32> to vector<8x96xf32>
    %157 = arith.negf %156 : vector<8x96xf32>
    %158 = math.exp %157 : vector<8x96xf32>
    %cst_51 = arith.constant 1.000000e+00 : f32
    %159 = vector.broadcast %cst_51 : f32 to vector<8x96xf32>
    %160 = arith.addf %159, %158 : vector<8x96xf32>
    %161 = arith.divf %159, %160 : vector<8x96xf32>
    %162 = vector.extract_strided_slice %155 {offsets = [0, 96], sizes = [8, 32], strides = [1, 1]} : vector<8x128xf32> to vector<8x32xf32>
    %163 = math.tanh %162 : vector<8x32xf32>
    %164 = vector.extract_strided_slice %161 {offsets = [0, 32], sizes = [8, 32], strides = [1, 1]} : vector<8x96xf32> to vector<8x32xf32>
    %165 = arith.mulf %164, %128 : vector<8x32xf32>
    %166 = vector.extract_strided_slice %161 {offsets = [0, 0], sizes = [8, 32], strides = [1, 1]} : vector<8x96xf32> to vector<8x32xf32>
    %167 = arith.mulf %166, %163 : vector<8x32xf32>
    %168 = arith.addf %165, %167 : vector<8x32xf32>
    %169 = vector.extract_strided_slice %161 {offsets = [0, 64], sizes = [8, 32], strides = [1, 1]} : vector<8x96xf32> to vector<8x32xf32>
    %170 = math.tanh %168 : vector<8x32xf32>
    %171 = arith.mulf %169, %170 : vector<8x32xf32>
    %172 = tpu.concatenate %171, %151 in 1 : vector<8x32xf32>, vector<8x32xf32> -> vector<8x64xf32>
    %cst_52 = arith.constant dense<0.000000e+00> : vector<8x128xf32>
    %173 = tpu.matmul %172, %66, %cst_52 {dimension_numbers = #tpu.dot_dimension_numbers<[1], [0], [0], [1], [0, 0, 1, 1], [], []>} : vector<8x64xf32>, vector<64x128xf32>, vector<8x128xf32> -> vector<8x128xf32>
    %174 = vector.broadcast %67 : vector<1x128xf32> to vector<8x128xf32>
    %175 = arith.addf %173, %174 : vector<8x128xf32>
    %176 = vector.extract_strided_slice %175 {offsets = [0, 0], sizes = [8, 96], strides = [1, 1]} : vector<8x128xf32> to vector<8x96xf32>
    %177 = arith.negf %176 : vector<8x96xf32>
    %178 = math.exp %177 : vector<8x96xf32>
    %cst_53 = arith.constant 1.000000e+00 : f32
    %179 = vector.broadcast %cst_53 : f32 to vector<8x96xf32>
    %180 = arith.addf %179, %178 : vector<8x96xf32>
    %181 = arith.divf %179, %180 : vector<8x96xf32>
    %182 = vector.extract_strided_slice %175 {offsets = [0, 96], sizes = [8, 32], strides = [1, 1]} : vector<8x128xf32> to vector<8x32xf32>
    %183 = math.tanh %182 : vector<8x32xf32>
    %184 = vector.extract_strided_slice %181 {offsets = [0, 32], sizes = [8, 32], strides = [1, 1]} : vector<8x96xf32> to vector<8x32xf32>
    %185 = arith.mulf %184, %148 : vector<8x32xf32>
    %186 = vector.extract_strided_slice %181 {offsets = [0, 0], sizes = [8, 32], strides = [1, 1]} : vector<8x96xf32> to vector<8x32xf32>
    %187 = arith.mulf %186, %183 : vector<8x32xf32>
    %188 = arith.addf %185, %187 : vector<8x32xf32>
    %189 = vector.extract_strided_slice %181 {offsets = [0, 64], sizes = [8, 32], strides = [1, 1]} : vector<8x96xf32> to vector<8x32xf32>
    %190 = math.tanh %188 : vector<8x32xf32>
    %191 = arith.mulf %189, %190 : vector<8x32xf32>
    %192 = vector.extract_strided_slice %64 {offsets = [3, 0, 0], sizes = [1, 8, 128], strides = [1, 1, 1]} : vector<4x8x128xf32> to vector<1x8x128xf32>
    %193 = vector.shape_cast %192 : vector<1x8x128xf32> to vector<8x128xf32>
    %cst_54 = arith.constant dense<0.000000e+00> : vector<8x128xf32>
    %194 = tpu.matmul %171, %65, %cst_54 {dimension_numbers = #tpu.dot_dimension_numbers<[1], [0], [0], [1], [0, 0, 1, 1], [], []>} : vector<8x32xf32>, vector<32x128xf32>, vector<8x128xf32> -> vector<8x128xf32>
    %195 = arith.addf %193, %194 : vector<8x128xf32>
    %196 = vector.extract_strided_slice %195 {offsets = [0, 0], sizes = [8, 96], strides = [1, 1]} : vector<8x128xf32> to vector<8x96xf32>
    %197 = arith.negf %196 : vector<8x96xf32>
    %198 = math.exp %197 : vector<8x96xf32>
    %cst_55 = arith.constant 1.000000e+00 : f32
    %199 = vector.broadcast %cst_55 : f32 to vector<8x96xf32>
    %200 = arith.addf %199, %198 : vector<8x96xf32>
    %201 = arith.divf %199, %200 : vector<8x96xf32>
    %202 = vector.extract_strided_slice %195 {offsets = [0, 96], sizes = [8, 32], strides = [1, 1]} : vector<8x128xf32> to vector<8x32xf32>
    %203 = math.tanh %202 : vector<8x32xf32>
    %204 = vector.extract_strided_slice %201 {offsets = [0, 32], sizes = [8, 32], strides = [1, 1]} : vector<8x96xf32> to vector<8x32xf32>
    %205 = arith.mulf %204, %168 : vector<8x32xf32>
    %206 = vector.extract_strided_slice %201 {offsets = [0, 0], sizes = [8, 32], strides = [1, 1]} : vector<8x96xf32> to vector<8x32xf32>
    %207 = arith.mulf %206, %203 : vector<8x32xf32>
    %208 = arith.addf %205, %207 : vector<8x32xf32>
    %209 = vector.extract_strided_slice %201 {offsets = [0, 64], sizes = [8, 32], strides = [1, 1]} : vector<8x96xf32> to vector<8x32xf32>
    %210 = math.tanh %208 : vector<8x32xf32>
    %211 = arith.mulf %209, %210 : vector<8x32xf32>
    %212 = tpu.concatenate %211, %191 in 1 : vector<8x32xf32>, vector<8x32xf32> -> vector<8x64xf32>
    %cst_56 = arith.constant dense<0.000000e+00> : vector<8x128xf32>
    %213 = tpu.matmul %212, %66, %cst_56 {dimension_numbers = #tpu.dot_dimension_numbers<[1], [0], [0], [1], [0, 0, 1, 1], [], []>} : vector<8x64xf32>, vector<64x128xf32>, vector<8x128xf32> -> vector<8x128xf32>
    %214 = vector.broadcast %67 : vector<1x128xf32> to vector<8x128xf32>
    %215 = arith.addf %213, %214 : vector<8x128xf32>
    %216 = vector.extract_strided_slice %215 {offsets = [0, 0], sizes = [8, 96], strides = [1, 1]} : vector<8x128xf32> to vector<8x96xf32>
    %217 = arith.negf %216 : vector<8x96xf32>
    %218 = math.exp %217 : vector<8x96xf32>
    %cst_57 = arith.constant 1.000000e+00 : f32
    %219 = vector.broadcast %cst_57 : f32 to vector<8x96xf32>
    %220 = arith.addf %219, %218 : vector<8x96xf32>
    %221 = arith.divf %219, %220 : vector<8x96xf32>
    %222 = vector.extract_strided_slice %215 {offsets = [0, 96], sizes = [8, 32], strides = [1, 1]} : vector<8x128xf32> to vector<8x32xf32>
    %223 = math.tanh %222 : vector<8x32xf32>
    %224 = vector.extract_strided_slice %221 {offsets = [0, 32], sizes = [8, 32], strides = [1, 1]} : vector<8x96xf32> to vector<8x32xf32>
    %225 = arith.mulf %224, %188 : vector<8x32xf32>
    %226 = vector.extract_strided_slice %221 {offsets = [0, 0], sizes = [8, 32], strides = [1, 1]} : vector<8x96xf32> to vector<8x32xf32>
    %227 = arith.mulf %226, %223 : vector<8x32xf32>
    %228 = arith.addf %225, %227 : vector<8x32xf32>
    %229 = vector.extract_strided_slice %221 {offsets = [0, 64], sizes = [8, 32], strides = [1, 1]} : vector<8x96xf32> to vector<8x32xf32>
    %230 = math.tanh %228 : vector<8x32xf32>
    %231 = arith.mulf %229, %230 : vector<8x32xf32>
    %c0_58 = arith.constant 0 : index
    %c0_59 = arith.constant 0 : index
    %232 = vector.load %arg2[%c0_58, %c0_59] : memref<8x16xf32, #tpu.memory_space<vmem>>, vector<8x16xf32>
    %233 = tpu.concatenate %211, %231, %232 in 1 : vector<8x32xf32>, vector<8x32xf32>, vector<8x16xf32> -> vector<8x80xf32>
    %c0_60 = arith.constant 0 : index
    %c0_61 = arith.constant 0 : index
    %234 = vector.load %arg12[%c0_60, %c0_61] : memref<80x32xf32, #tpu.memory_space<vmem>>, vector<80x32xf32>
    %cst_62 = arith.constant dense<0.000000e+00> : vector<8x32xf32>
    %235 = tpu.matmul %233, %234, %cst_62 {dimension_numbers = #tpu.dot_dimension_numbers<[1], [0], [0], [1], [0, 0, 1, 1], [], []>} : vector<8x80xf32>, vector<80x32xf32>, vector<8x32xf32> -> vector<8x32xf32>
    %c0_63 = arith.constant 0 : index
    %c0_64 = arith.constant 0 : index
    %236 = vector.load %arg13[%c0_63, %c0_64] : memref<1x32xf32, #tpu.memory_space<vmem>>, vector<1x32xf32>
    %237 = vector.broadcast %236 : vector<1x32xf32> to vector<8x32xf32>
    %238 = arith.addf %235, %237 : vector<8x32xf32>
    %cst_65 = arith.constant 0.000000e+00 : f32
    %239 = vector.broadcast %cst_65 : f32 to vector<8x32xf32>
    %240 = arith.maximumf %238, %239 : vector<8x32xf32>
    %c0_66 = arith.constant 0 : index
    %c0_67 = arith.constant 0 : index
    %241 = vector.load %arg14[%c0_66, %c0_67] : memref<32x128xf32, #tpu.memory_space<vmem>>, vector<32x128xf32>
    %cst_68 = arith.constant dense<0.000000e+00> : vector<8x128xf32>
    %242 = tpu.matmul %240, %241, %cst_68 {dimension_numbers = #tpu.dot_dimension_numbers<[1], [0], [0], [1], [0, 0, 1, 1], [], []>} : vector<8x32xf32>, vector<32x128xf32>, vector<8x128xf32> -> vector<8x128xf32>
    %c0_69 = arith.constant 0 : index
    %c0_70 = arith.constant 0 : index
    %243 = vector.load %arg15[%c0_69, %c0_70] : memref<1x128xf32, #tpu.memory_space<vmem>>, vector<1x128xf32>
    %244 = vector.broadcast %243 : vector<1x128xf32> to vector<8x128xf32>
    %245 = arith.addf %242, %244 : vector<8x128xf32>
    %cst_71 = arith.constant 0.000000e+00 : f32
    %246 = vector.broadcast %cst_71 : f32 to vector<8x128xf32>
    %247 = arith.maximumf %245, %246 : vector<8x128xf32>
    %c0_72 = arith.constant 0 : index
    %c0_73 = arith.constant 0 : index
    %248 = vector.load %arg16[%c0_72, %c0_73] : memref<8x128xf32, #tpu.memory_space<vmem>>, vector<8x128xf32>
    tpu.vector_store %arg16[%c0_72, %c0_73], %247 {strides = array<i32>} : memref<8x128xf32, #tpu.memory_space<vmem>>, vector<8x128xf32>,
    return
  }
}

</mosaic_0001>

<llo_original>
// kernel: tpu_custom_call.1
$region0: #{tpu_custom_call.1}
  #allocation0 [shape = 'u32[]', space=smem, size = 0x4, offset = 0x4, fixed_abs, tag = 'smem constant byte address 0x4 - core index']
  #allocation1 [shape = 'u32[144,128]{1,0:T(1,128)}', space=vmem, size = 0x12000, scoped, tag = 'internal scratch']
  %s0 = inlined_call_operand.hbm [shape: f32[4,8,8], index: 0, kind: input, shape index: {}]
  %s1 = inlined_call_operand.vmem [shape: f32[32,4], index: 1, kind: input, shape index: {}]
  %s2 = inlined_call_operand.hbm [shape: f32[8,16], index: 2, kind: input, shape index: {}]
  %s3 = inlined_call_operand.hbm [shape: f32[4,32], index: 3, kind: input, shape index: {}]
  %s4 = inlined_call_operand.vmem [shape: f32[1,32], index: 4, kind: input, shape index: {}]
  %s5 = inlined_call_operand.hbm [shape: f32[32,32], index: 5, kind: input, shape index: {}]
  %s6 = inlined_call_operand.hbm [shape: f32[1,32], index: 6, kind: input, shape index: {}]
  %s7 = inlined_call_operand.vmem [shape: f32[64,128], index: 7, kind: input, shape index: {}]
  %s8 = inlined_call_operand.hbm [shape: f32[32,128], index: 8, kind: input, shape index: {}]
  %s9 = inlined_call_operand.hbm [shape: f32[1,128], index: 9, kind: input, shape index: {}]
  %s10 = inlined_call_operand.vmem [shape: f32[64,128], index: 10, kind: input, shape index: {}]
  %s11 = inlined_call_operand.hbm [shape: f32[1,128], index: 11, kind: input, shape index: {}]
  %s12 = inlined_call_operand.vmem [shape: f32[80,32], index: 12, kind: input, shape index: {}]
  %s13 = inlined_call_operand.vmem [shape: f32[1,32], index: 13, kind: input, shape index: {}]
  %s14 = inlined_call_operand.vmem [shape: f32[32,128], index: 14, kind: input, shape index: {}]
  %s15 = inlined_call_operand.vmem [shape: f32[1,128], index: 15, kind: input, shape index: {}]
  %s16 = inlined_call_operand.hbm [shape: f32[8,128], index: 16, kind: output, shape index: {}]
  %s17 = sld [smem:[#allocation0]]
  $region106: #{tpu_custom_call.1} parent=0
    _
  %s19 = ssub.s32 1, %s17
  %s20 = scalar_select 0, %s19, %s17
  $region1: #{tpu_custom_call.1} parent=0
    #allocation2 [shape = 'u8[16384]{0}', space=vmem, size = 0x4000, scoped, tag = 'input window, operand 0, single buffered']
    #allocation3 [shape = 's32[1]{0}', space=sflag, size = 0x4, scoped, tag = 'scoped memory for tpu_custom_call.1']
    #allocation4 [shape = 's32[1]{0}', space=sflag, size = 0x4, scoped, tag = 'scoped memory for tpu_custom_call.1']
    #allocation5 [shape = 'u8[4096]{0}', space=vmem, size = 0x1000, scoped, tag = 'input window, operand 2, single buffered']
    #allocation6 [shape = 's32[1]{0}', space=sflag, size = 0x4, scoped, tag = 'scoped memory for tpu_custom_call.1']
    #allocation7 [shape = 'u8[2048]{0}', space=vmem, size = 0x800, scoped, tag = 'input window, operand 3, single buffered']
    #allocation8 [shape = 'u8[16384]{0}', space=vmem, size = 0x4000, scoped, tag = 'input window, operand 5, single buffered']
    #allocation9 [shape = 's32[1]{0}', space=sflag, size = 0x4, scoped, tag = 'scoped memory for tpu_custom_call.1']
    #allocation10 [shape = 'u8[512]{0}', space=vmem, size = 0x400, scoped, tag = 'input window, operand 6, single buffered']
    #allocation11 [shape = 'u8[16384]{0}', space=vmem, size = 0x4000, scoped, tag = 'input window, operand 8, single buffered']
    #allocation12 [shape = 's32[1]{0}', space=sflag, size = 0x4, scoped, tag = 'scoped memory for tpu_custom_call.1']
    #allocation13 [shape = 'u8[512]{0}', space=vmem, size = 0x400, scoped, tag = 'input window, operand 9, single buffered']
    #allocation14 [shape = 'u8[512]{0}', space=vmem, size = 0x400, scoped, tag = 'input window, operand 11, single buffered']
    #allocation15 [shape = 's32[1]{0}', space=sflag, size = 0x4, scoped, tag = 'scoped memory for tpu_custom_call.1']
    #allocation16 [shape = 'u8[4096]{0}', space=vmem, size = 0x1000, scoped, tag = 'output window, operand 0, single buffered']
    %21 = vsyncpa [#allocation3], 0
    %22 = vsyncpa [#allocation6], 0
    %23 = vsyncpa [#allocation9], 0
    %24 = vsyncpa [#allocation12], 0
    %25 = vsyncpa [#allocation15], 0
    %26 = vsyncpa [#allocation4], 0
    // Predicated region
    $region2: #{tpu_custom_call.1} parent=1 // pred_check
      _
    $region3: #{tpu_custom_call.1} parent=1 // pred_check_branch
      %28 = sbr.rel (0) target = $region5
    $region4: #{tpu_custom_call.1} parent=1 // pred_region
      %s30 = ssub.s32 512, 512
      %31 = vsyncadd [#allocation3], %s30
      %s32 = sshll.u32 [#allocation2], 4
      %s33 = int_to_ptr.vmem [resolvable:$true] %s32
      %38 = dma.hbm_to_vmem [thread:$0]  %s0, 512, %s33, [#allocation3], 128, 128, 8
    $region5: #{tpu_custom_call.1} parent=1 // pred_fallthru
      _
    // Predicated region
    $region6: #{tpu_custom_call.1} parent=1 // pred_check
      _
    $region7: #{tpu_custom_call.1} parent=1 // pred_check_branch
      %40 = sbr.rel (0) target = $region9
    $region8: #{tpu_custom_call.1} parent=1 // pred_region
      _
    $region9: #{tpu_custom_call.1} parent=1 // pred_fallthru
      _
    // Predicated region
    $region10: #{tpu_custom_call.1} parent=1 // pred_check
      _
    $region11: #{tpu_custom_call.1} parent=1 // pred_check_branch
      %42 = sbr.rel (0) target = $region13
    $region12: #{tpu_custom_call.1} parent=1 // pred_region
      %s44 = ssub.s32 128, 128
      %45 = vsyncadd [#allocation6], %s44
      %s47 = sshll.u32 [#allocation5], 4
      %s48 = int_to_ptr.vmem [resolvable:$true] %s47
      %50 = dma.hbm_to_vmem [thread:$0]  %s2, 128, %s48, [#allocation6]
    $region13: #{tpu_custom_call.1} parent=1 // pred_fallthru
      _
    // Predicated region
    $region14: #{tpu_custom_call.1} parent=1 // pred_check
      _
    $region15: #{tpu_custom_call.1} parent=1 // pred_check_branch
      %52 = sbr.rel (0) target = $region17
    $region16: #{tpu_custom_call.1} parent=1 // pred_region
      %s54 = ssub.s32 64, 64
      %55 = vsyncadd [#allocation6], %s54
      %s57 = sshll.u32 [#allocation7], 4
      %s58 = int_to_ptr.vmem [resolvable:$true] %s57
      %60 = dma.hbm_to_vmem [thread:$0]  %s3, 64, %s58, [#allocation6]
    $region17: #{tpu_custom_call.1} parent=1 // pred_fallthru
      _
    // Predicated region
    $region18: #{tpu_custom_call.1} parent=1 // pred_check
      _
    $region19: #{tpu_custom_call.1} parent=1 // pred_check_branch
      %62 = sbr.rel (0) target = $region21
    $region20: #{tpu_custom_call.1} parent=1 // pred_region
      _
    $region21: #{tpu_custom_call.1} parent=1 // pred_fallthru
      _
    // Predicated region
    $region22: #{tpu_custom_call.1} parent=1 // pred_check
      _
    $region23: #{tpu_custom_call.1} parent=1 // pred_check_branch
      %64 = sbr.rel (0) target = $region25
    $region24: #{tpu_custom_call.1} parent=1 // pred_region
      %s66 = ssub.s32 512, 512
      %67 = vsyncadd [#allocation9], %s66
      %s68 = sshll.u32 [#allocation8], 4
      %s69 = int_to_ptr.vmem [resolvable:$true] %s68
      %74 = dma.hbm_to_vmem [thread:$0]  %s5, 512, %s69, [#allocation9], 128, 128, 8
    $region25: #{tpu_custom_call.1} parent=1 // pred_fallthru
      _
    // Predicated region
    $region26: #{tpu_custom_call.1} parent=1 // pred_check
      _
    $region27: #{tpu_custom_call.1} parent=1 // pred_check_branch
      %76 = sbr.rel (0) target = $region29
    $region28: #{tpu_custom_call.1} parent=1 // pred_region
      %s78 = ssub.s32 16, 16
      %79 = vsyncadd [#allocation9], %s78
      %s81 = sshll.u32 [#allocation10], 4
      %s82 = int_to_ptr.vmem [resolvable:$true] %s81
      %84 = dma.hbm_to_vmem [thread:$0]  %s6, 16, %s82, [#allocation9]
    $region29: #{tpu_custom_call.1} parent=1 // pred_fallthru
      _
    // Predicated region
    $region30: #{tpu_custom_call.1} parent=1 // pred_check
      _
    $region31: #{tpu_custom_call.1} parent=1 // pred_check_branch
      %86 = sbr.rel (0) target = $region33
    $region32: #{tpu_custom_call.1} parent=1 // pred_region
      _
    $region33: #{tpu_custom_call.1} parent=1 // pred_fallthru
      _
    // Predicated region
    $region34: #{tpu_custom_call.1} parent=1 // pred_check
      _
    $region35: #{tpu_custom_call.1} parent=1 // pred_check_branch
      %88 = sbr.rel (0) target = $region37
    $region36: #{tpu_custom_call.1} parent=1 // pred_region
      %s90 = ssub.s32 512, 512
      %91 = vsyncadd [#allocation12], %s90
      %s92 = sshll.u32 [#allocation11], 4
      %s93 = int_to_ptr.vmem [resolvable:$true] %s92
      %98 = dma.hbm_to_vmem [thread:$0]  %s8, 512, %s93, [#allocation12], 128, 128, 8
    $region37: #{tpu_custom_call.1} parent=1 // pred_fallthru
      _
    // Predicated region
    $region38: #{tpu_custom_call.1} parent=1 // pred_check
      _
    $region39: #{tpu_custom_call.1} parent=1 // pred_check_branch
      %100 = sbr.rel (0) target = $region41
    $region40: #{tpu_custom_call.1} parent=1 // pred_region
      %s102 = ssub.s32 16, 16
      %103 = vsyncadd [#allocation12], %s102
      %s105 = sshll.u32 [#allocation13], 4
      %s106 = int_to_ptr.vmem [resolvable:$true] %s105
      %108 = dma.hbm_to_vmem [thread:$0]  %s9, 16, %s106, [#allocation12]
    $region41: #{tpu_custom_call.1} parent=1 // pred_fallthru
      _
    // Predicated region
    $region42: #{tpu_custom_call.1} parent=1 // pred_check
      _
    $region43: #{tpu_custom_call.1} parent=1 // pred_check_branch
      %110 = sbr.rel (0) target = $region45
    $region44: #{tpu_custom_call.1} parent=1 // pred_region
      _
    $region45: #{tpu_custom_call.1} parent=1 // pred_fallthru
      _
    // Predicated region
    $region46: #{tpu_custom_call.1} parent=1 // pred_check
      _
    $region47: #{tpu_custom_call.1} parent=1 // pred_check_branch
      %112 = sbr.rel (0) target = $region49
    $region48: #{tpu_custom_call.1} parent=1 // pred_region
      %s114 = ssub.s32 16, 16
      %115 = vsyncadd [#allocation15], %s114
      %s117 = sshll.u32 [#allocation14], 4
      %s118 = int_to_ptr.vmem [resolvable:$true] %s117
      %120 = dma.hbm_to_vmem [thread:$0]  %s11, 16, %s118, [#allocation15]
    $region49: #{tpu_custom_call.1} parent=1 // pred_fallthru
      _
    // Predicated region
    $region50: #{tpu_custom_call.1} parent=1 // pred_check
      _
    $region51: #{tpu_custom_call.1} parent=1 // pred_check_branch
      %122 = sbr.rel (0) target = $region53
    $region52: #{tpu_custom_call.1} parent=1 // pred_region
      _
    $region53: #{tpu_custom_call.1} parent=1 // pred_fallthru
      _
    // Predicated region
    $region54: #{tpu_custom_call.1} parent=1 // pred_check
      _
    $region55: #{tpu_custom_call.1} parent=1 // pred_check_branch
      %124 = sbr.rel (0) target = $region57
    $region56: #{tpu_custom_call.1} parent=1 // pred_region
      _
    $region57: #{tpu_custom_call.1} parent=1 // pred_fallthru
      _
    // Predicated region
    $region58: #{tpu_custom_call.1} parent=1 // pred_check
      _
    $region59: #{tpu_custom_call.1} parent=1 // pred_check_branch
      %126 = sbr.rel (0) target = $region61
    $region60: #{tpu_custom_call.1} parent=1 // pred_region
      _
    $region61: #{tpu_custom_call.1} parent=1 // pred_fallthru
      _
    // Predicated region
    $region62: #{tpu_custom_call.1} parent=1 // pred_check
      _
    $region63: #{tpu_custom_call.1} parent=1 // pred_check_branch
      %128 = sbr.rel (0) target = $region65
    $region64: #{tpu_custom_call.1} parent=1 // pred_region
      _
    $region65: #{tpu_custom_call.1} parent=1 // pred_fallthru
      _
    // Predicated region
    $region66: #{tpu_custom_call.1} parent=1 // pred_check
      _
    $region67: #{tpu_custom_call.1} parent=1 // pred_check_branch
      %130 = sbr.rel (0) target = $region69
    $region68: #{tpu_custom_call.1} parent=1 // pred_region
      %131 = dma.done [#allocation3], 512
    $region69: #{tpu_custom_call.1} parent=1 // pred_fallthru
      _
    // Predicated region
    $region70: #{tpu_custom_call.1} parent=1 // pred_check
      _
    $region71: #{tpu_custom_call.1} parent=1 // pred_check_branch
      %133 = sbr.rel (0) target = $region73
    $region72: #{tpu_custom_call.1} parent=1 // pred_region
      %134 = dma.done [#allocation6], 128
    $region73: #{tpu_custom_call.1} parent=1 // pred_fallthru
      _
    // Predicated region
    $region74: #{tpu_custom_call.1} parent=1 // pred_check
      _
    $region75: #{tpu_custom_call.1} parent=1 // pred_check_branch
      %136 = sbr.rel (0) target = $region77
    $region76: #{tpu_custom_call.1} parent=1 // pred_region
      %137 = dma.done [#allocation6], 64
    $region77: #{tpu_custom_call.1} parent=1 // pred_fallthru
      _
    // Predicated region
    $region78: #{tpu_custom_call.1} parent=1 // pred_check
      _
    $region79: #{tpu_custom_call.1} parent=1 // pred_check_branch
      %139 = sbr.rel (0) target = $region81
    $region80: #{tpu_custom_call.1} parent=1 // pred_region
      %140 = dma.done [#allocation9], 512
    $region81: #{tpu_custom_call.1} parent=1 // pred_fallthru
      _
    // Predicated region
    $region82: #{tpu_custom_call.1} parent=1 // pred_check
      _
    $region83: #{tpu_custom_call.1} parent=1 // pred_check_branch
      %142 = sbr.rel (0) target = $region85
    $region84: #{tpu_custom_call.1} parent=1 // pred_region
      %143 = dma.done [#allocation9], 16
    $region85: #{tpu_custom_call.1} parent=1 // pred_fallthru
      _
    // Predicated region
    $region86: #{tpu_custom_call.1} parent=1 // pred_check
      _
    $region87: #{tpu_custom_call.1} parent=1 // pred_check_branch
      %145 = sbr.rel (0) target = $region89
    $region88: #{tpu_custom_call.1} parent=1 // pred_region
      %146 = dma.done [#allocation12], 512
    $region89: #{tpu_custom_call.1} parent=1 // pred_fallthru
      _
    // Predicated region
    $region90: #{tpu_custom_call.1} parent=1 // pred_check
      _
    $region91: #{tpu_custom_call.1} parent=1 // pred_check_branch
      %148 = sbr.rel (0) target = $region93
    $region92: #{tpu_custom_call.1} parent=1 // pred_region
      %149 = dma.done [#allocation12], 16
    $region93: #{tpu_custom_call.1} parent=1 // pred_fallthru
      _
    // Predicated region
    $region94: #{tpu_custom_call.1} parent=1 // pred_check
      _
    $region95: #{tpu_custom_call.1} parent=1 // pred_check_branch
      %151 = sbr.rel (0) target = $region97
    $region96: #{tpu_custom_call.1} parent=1 // pred_region
      %152 = dma.done [#allocation15], 16
    $region97: #{tpu_custom_call.1} parent=1 // pred_fallthru
      _
    %v153 = vld [vmem:[#allocation2] sm:$0xff]
    %v154 = vld [vmem:[#allocation2 + $0x8] sm:$0xff]
    %v155 = vld [vmem:[#allocation2 + $0x10] sm:$0xff]
    %v156 = vld [vmem:[#allocation2 + $0x18] sm:$0xff]
    %v157 = vld [vmem:[%s1] sm:$0xff]
    %v158 = vld [vmem:[%s1 + $0x8] sm:$0xff]
    %v159 = vld [vmem:[%s1 + $0x10] sm:$0xff]
    %v160 = vld [vmem:[%s1 + $0x18] sm:$0xff]
    %v161 = vld [vmem:[#allocation7] sm:$0xf]
    %v162 = vld [vmem:[%s4] sm:$0x1]
    %vm163 = vcmask 31744
    %v165 = vsel %vm163, %v157, 0
    %v168 = vsel %vm163, %v158, 0
    %v171 = vsel %vm163, %v159, 0
    %v174 = vsel %vm163, %v160, 0
    %vm176 = vcmask 1043456
    %v178 = vsel %vm176, %v161, 0
    %180 = vmatprep.subr.mxu0 0.0
    %181 = vmatpush1.msra.mxu0 %v178
    %182 = vmatprep.subr.mxu0 0.0
    %183 = vmatpush1.msra.mxu0 0.0
    %184 = vmatprep.subr.mxu0 0.0
    %185 = vmatpush1.msra.mxu0 0.0
    %186 = vmatprep.subr.mxu0 0.0
    %187 = vmatpush1.msra.mxu0 0.0
    %188 = vmatprep.subr.mxu0 0.0
    %189 = vmatpush1.msra.mxu0 0.0
    %190 = vmatprep.subr.mxu0 0.0
    %191 = vmatpush1.msra.mxu0 0.0
    %192 = vmatprep.subr.mxu0 0.0
    %193 = vmatpush1.msra.mxu0 0.0
    %194 = vmatprep.subr.mxu0 0.0
    %195 = vmatpush1.msra.mxu0 0.0
    %196 = vmatprep.subr.mxu0 0.0
    %197 = vmatpush1.msra.mxu0 0.0
    %198 = vmatprep.subr.mxu0 0.0
    %199 = vmatpush1.msra.mxu0 0.0
    %200 = vmatprep.subr.mxu0 0.0
    %201 = vmatpush1.msra.mxu0 0.0
    %202 = vmatprep.subr.mxu0 0.0
    %203 = vmatpush1.msra.mxu0 0.0
    %204 = vmatprep.subr.mxu0 0.0
    %205 = vmatpush1.msra.mxu0 0.0
    %206 = vmatprep.subr.mxu0 0.0
    %207 = vmatpush1.msra.mxu0 0.0
    %208 = vmatprep.subr.mxu0 0.0
    %209 = vmatpush1.msra.mxu0 0.0
    %210 = vmatprep.subr.mxu0 0.0
    %211 = vmatpush1.msra.mxu0 0.0
    %212 = vmatprep.subr.mxu0 0.0
    %213 = vmatpush1.msra.mxu0 0.0
    %214 = vmatprep.subr.mxu0 0.0
    %215 = vmatpush1.msra.mxu0 0.0
    %216 = vmatprep.subr.mxu0 0.0
    %217 = vmatpush1.msra.mxu0 0.0
    %218 = vmatprep.subr.mxu0 0.0
    %219 = vmatpush1.msra.mxu0 0.0
    %220 = vmatprep.subr.mxu0 0.0
    %221 = vmatpush1.msra.mxu0 0.0
    %222 = vmatprep.subr.mxu0 0.0
    %223 = vmatpush1.msra.mxu0 0.0
    %224 = vmatprep.subr.mxu0 0.0
    %225 = vmatpush1.msra.mxu0 0.0
    %226 = vmatprep.subr.mxu0 0.0
    %227 = vmatpush1.msra.mxu0 0.0
    %228 = vmatprep.subr.mxu0 0.0
    %229 = vmatpush1.msra.mxu0 0.0
    %230 = vmatprep.subr.mxu0 0.0
    %231 = vmatpush1.msra.mxu0 0.0
    %232 = vmatprep.subr.mxu0 0.0
    %233 = vmatpush1.msra.mxu0 0.0
    %234 = vmatprep.subr.mxu0 0.0
    %235 = vmatpush1.msra.mxu0 0.0
    %236 = vmatprep.subr.mxu0 0.0
    %237 = vmatpush1.msra.mxu0 0.0
    %238 = vmatprep.subr.mxu0 0.0
    %239 = vmatpush1.msra.mxu0 0.0
    %240 = vmatprep.subr.mxu0 0.0
    %241 = vmatpush1.msra.mxu0 0.0
    %242 = vmatprep.subr.mxu0 0.0
    %243 = vmatpush1.msra.mxu0 0.0
    %244 = vmatprep.mubr.f32.mxu0 0.0
    %245 = vmatmul.mubr.f32.gmra.mrb[0].mxu0 %v165
    %v246 = vpop.f32.mrb[0].mxu0
    %v247 = vadd.f32 0.0, %v246
    %v248 = vpop.f32.mrb[0].mxu0
    %249 = vmatprep.mubr.f32.mxu0 0.0
    %250 = vmatmul.mubr.f32.gmra.mrb[0].mxu0 %v168
    %v251 = vpop.f32.mrb[0].mxu0
    %v252 = vadd.f32 0.0, %v251
    %v253 = vpop.f32.mrb[0].mxu0
    %254 = vmatprep.mubr.f32.mxu0 0.0
    %255 = vmatmul.mubr.f32.gmra.mrb[0].mxu0 %v171
    %v256 = vpop.f32.mrb[0].mxu0
    %v257 = vadd.f32 0.0, %v256
    %v258 = vpop.f32.mrb[0].mxu0
    %259 = vmatprep.mubr.f32.mxu0 0.0
    %260 = vmatmul.mubr.f32.gmra.mrb[0].mxu0 %v174
    %v261 = vpop.f32.mrb[0].mxu0
    %v262 = vadd.f32 0.0, %v261
    %v263 = vpop.f32.mrb[0].mxu0
    %264 = vdwg.mxu0
    %vm265 = vcmask 64512
    %v267 = vsel %vm265, %v153, 0
    %269 = vmatprep.subr.mxu0 0.0
    %270 = vmatpush1.msra.mxu0 %v247
    %271 = vmatprep.subr.mxu0 0.0
    %272 = vmatpush1.msra.mxu0 0.0
    %273 = vmatprep.subr.mxu0 0.0
    %274 = vmatpush1.msra.mxu0 0.0
    %275 = vmatprep.subr.mxu0 0.0
    %276 = vmatpush1.msra.mxu0 0.0
    %277 = vmatprep.subr.mxu0 0.0
    %278 = vmatpush1.msra.mxu0 0.0
    %279 = vmatprep.subr.mxu0 0.0
    %280 = vmatpush1.msra.mxu0 0.0
    %281 = vmatprep.subr.mxu0 0.0
    %282 = vmatpush1.msra.mxu0 0.0
    %283 = vmatprep.subr.mxu0 0.0
    %284 = vmatpush1.msra.mxu0 0.0
    %285 = vmatprep.subr.mxu0 0.0
    %286 = vmatpush1.msra.mxu0 0.0
    %287 = vmatprep.subr.mxu0 0.0
    %288 = vmatpush1.msra.mxu0 0.0
    %289 = vmatprep.subr.mxu0 0.0
    %290 = vmatpush1.msra.mxu0 0.0
    %291 = vmatprep.subr.mxu0 0.0
    %292 = vmatpush1.msra.mxu0 0.0
    %293 = vmatprep.subr.mxu0 0.0
    %294 = vmatpush1.msra.mxu0 0.0
    %295 = vmatprep.subr.mxu0 0.0
    %296 = vmatpush1.msra.mxu0 0.0
    %297 = vmatprep.subr.mxu0 0.0
    %298 = vmatpush1.msra.mxu0 0.0
    %299 = vmatprep.subr.mxu0 0.0
    %300 = vmatpush1.msra.mxu0 0.0
    %301 = vmatprep.subr.mxu0 0.0
    %302 = vmatpush1.msra.mxu0 0.0
    %303 = vmatprep.subr.mxu0 0.0
    %304 = vmatpush1.msra.mxu0 0.0
    %305 = vmatprep.subr.mxu0 0.0
    %306 = vmatpush1.msra.mxu0 0.0
    %307 = vmatprep.subr.mxu0 0.0
    %308 = vmatpush1.msra.mxu0 0.0
    %309 = vmatprep.subr.mxu0 0.0
    %310 = vmatpush1.msra.mxu0 0.0
    %311 = vmatprep.subr.mxu0 0.0
    %312 = vmatpush1.msra.mxu0 0.0
    %313 = vmatprep.subr.mxu0 0.0
    %314 = vmatpush1.msra.mxu0 0.0
    %315 = vmatprep.subr.mxu0 0.0
    %316 = vmatpush1.msra.mxu0 0.0
    %317 = vmatprep.subr.mxu0 0.0
    %318 = vmatpush1.msra.mxu0 0.0
    %319 = vmatprep.subr.mxu0 0.0
    %320 = vmatpush1.msra.mxu0 0.0
    %321 = vmatprep.subr.mxu0 0.0
    %322 = vmatpush1.msra.mxu0 0.0
    %323 = vmatprep.subr.mxu0 0.0
    %324 = vmatpush1.msra.mxu0 0.0
    %325 = vmatprep.subr.mxu0 0.0
    %326 = vmatpush1.msra.mxu0 0.0
    %327 = vmatprep.subr.mxu0 0.0
    %328 = vmatpush1.msra.mxu0 0.0
    %329 = vmatprep.subr.mxu0 0.0
    %330 = vmatpush1.msra.mxu0 0.0
    %331 = vmatprep.subr.mxu0 0.0
    %332 = vmatpush1.msra.mxu0 0.0
    %333 = vmatprep.mubr.f32.mxu0 0.0
    %334 = vmatmul.mubr.f32.gmra.mrb[0].mxu0 %v267
    %v335 = vpop.f32.mrb[0].mxu0
    %v336 = vadd.f32 0.0, %v335
    %v337 = vpop.f32.mrb[0].mxu0
    %338 = vdwg.mxu0
    %v340 = vsel %vm265, %v154, 0
    %342 = vmatprep.subr.mxu0 0.0
    %343 = vmatpush1.msra.mxu0 %v252
    %344 = vmatprep.subr.mxu0 0.0
    %345 = vmatpush1.msra.mxu0 0.0
    %346 = vmatprep.subr.mxu0 0.0
    %347 = vmatpush1.msra.mxu0 0.0
    %348 = vmatprep.subr.mxu0 0.0
    %349 = vmatpush1.msra.mxu0 0.0
    %350 = vmatprep.subr.mxu0 0.0
    %351 = vmatpush1.msra.mxu0 0.0
    %352 = vmatprep.subr.mxu0 0.0
    %353 = vmatpush1.msra.mxu0 0.0
    %354 = vmatprep.subr.mxu0 0.0
    %355 = vmatpush1.msra.mxu0 0.0
    %356 = vmatprep.subr.mxu0 0.0
    %357 = vmatpush1.msra.mxu0 0.0
    %358 = vmatprep.subr.mxu0 0.0
    %359 = vmatpush1.msra.mxu0 0.0
    %360 = vmatprep.subr.mxu0 0.0
    %361 = vmatpush1.msra.mxu0 0.0
    %362 = vmatprep.subr.mxu0 0.0
    %363 = vmatpush1.msra.mxu0 0.0
    %364 = vmatprep.subr.mxu0 0.0
    %365 = vmatpush1.msra.mxu0 0.0
    %366 = vmatprep.subr.mxu0 0.0
    %367 = vmatpush1.msra.mxu0 0.0
    %368 = vmatprep.subr.mxu0 0.0
    %369 = vmatpush1.msra.mxu0 0.0
    %370 = vmatprep.subr.mxu0 0.0
    %371 = vmatpush1.msra.mxu0 0.0
    %372 = vmatprep.subr.mxu0 0.0
    %373 = vmatpush1.msra.mxu0 0.0
    %374 = vmatprep.subr.mxu0 0.0
    %375 = vmatpush1.msra.mxu0 0.0
    %376 = vmatprep.subr.mxu0 0.0
    %377 = vmatpush1.msra.mxu0 0.0
    %378 = vmatprep.subr.mxu0 0.0
    %379 = vmatpush1.msra.mxu0 0.0
    %380 = vmatprep.subr.mxu0 0.0
    %381 = vmatpush1.msra.mxu0 0.0
    %382 = vmatprep.subr.mxu0 0.0
    %383 = vmatpush1.msra.mxu0 0.0
    %384 = vmatprep.subr.mxu0 0.0
    %385 = vmatpush1.msra.mxu0 0.0
    %386 = vmatprep.subr.mxu0 0.0
    %387 = vmatpush1.msra.mxu0 0.0
    %388 = vmatprep.subr.mxu0 0.0
    %389 = vmatpush1.msra.mxu0 0.0
    %390 = vmatprep.subr.mxu0 0.0
    %391 = vmatpush1.msra.mxu0 0.0
    %392 = vmatprep.subr.mxu0 0.0
    %393 = vmatpush1.msra.mxu0 0.0
    %394 = vmatprep.subr.mxu0 0.0
    %395 = vmatpush1.msra.mxu0 0.0
    %396 = vmatprep.subr.mxu0 0.0
    %397 = vmatpush1.msra.mxu0 0.0
    %398 = vmatprep.subr.mxu0 0.0
    %399 = vmatpush1.msra.mxu0 0.0
    %400 = vmatprep.subr.mxu0 0.0
    %401 = vmatpush1.msra.mxu0 0.0
    %402 = vmatprep.subr.mxu0 0.0
    %403 = vmatpush1.msra.mxu0 0.0
    %404 = vmatprep.subr.mxu0 0.0
    %405 = vmatpush1.msra.mxu0 0.0
    %406 = vmatprep.mubr.f32.mxu0 0.0
    %407 = vmatmul.mubr.f32.gmra.mrb[0].mxu0 %v340
    %v408 = vpop.f32.mrb[0].mxu0
    %v409 = vadd.f32 0.0, %v408
    %v410 = vpop.f32.mrb[0].mxu0
    %411 = vdwg.mxu0
    %v413 = vsel %vm265, %v155, 0
    %415 = vmatprep.subr.mxu0 0.0
    %416 = vmatpush1.msra.mxu0 %v257
    %417 = vmatprep.subr.mxu0 0.0
    %418 = vmatpush1.msra.mxu0 0.0
    %419 = vmatprep.subr.mxu0 0.0
    %420 = vmatpush1.msra.mxu0 0.0
    %421 = vmatprep.subr.mxu0 0.0
    %422 = vmatpush1.msra.mxu0 0.0
    %423 = vmatprep.subr.mxu0 0.0
    %424 = vmatpush1.msra.mxu0 0.0
    %425 = vmatprep.subr.mxu0 0.0
    %426 = vmatpush1.msra.mxu0 0.0
    %427 = vmatprep.subr.mxu0 0.0
    %428 = vmatpush1.msra.mxu0 0.0
    %429 = vmatprep.subr.mxu0 0.0
    %430 = vmatpush1.msra.mxu0 0.0
    %431 = vmatprep.subr.mxu0 0.0
    %432 = vmatpush1.msra.mxu0 0.0
    %433 = vmatprep.subr.mxu0 0.0
    %434 = vmatpush1.msra.mxu0 0.0
    %435 = vmatprep.subr.mxu0 0.0
    %436 = vmatpush1.msra.mxu0 0.0
    %437 = vmatprep.subr.mxu0 0.0
    %438 = vmatpush1.msra.mxu0 0.0
    %439 = vmatprep.subr.mxu0 0.0
    %440 = vmatpush1.msra.mxu0 0.0
    %441 = vmatprep.subr.mxu0 0.0
    %442 = vmatpush1.msra.mxu0 0.0
    %443 = vmatprep.subr.mxu0 0.0
    %444 = vmatpush1.msra.mxu0 0.0
    %445 = vmatprep.subr.mxu0 0.0
    %446 = vmatpush1.msra.mxu0 0.0
    %447 = vmatprep.subr.mxu0 0.0
    %448 = vmatpush1.msra.mxu0 0.0
    %449 = vmatprep.subr.mxu0 0.0
    %450 = vmatpush1.msra.mxu0 0.0
    %451 = vmatprep.subr.mxu0 0.0
    %452 = vmatpush1.msra.mxu0 0.0
    %453 = vmatprep.subr.mxu0 0.0
    %454 = vmatpush1.msra.mxu0 0.0
    %455 = vmatprep.subr.mxu0 0.0
    %456 = vmatpush1.msra.mxu0 0.0
    %457 = vmatprep.subr.mxu0 0.0
    %458 = vmatpush1.msra.mxu0 0.0
    %459 = vmatprep.subr.mxu0 0.0
    %460 = vmatpush1.msra.mxu0 0.0
    %461 = vmatprep.subr.mxu0 0.0
    %462 = vmatpush1.msra.mxu0 0.0
    %463 = vmatprep.subr.mxu0 0.0
    %464 = vmatpush1.msra.mxu0 0.0
    %465 = vmatprep.subr.mxu0 0.0
    %466 = vmatpush1.msra.mxu0 0.0
    %467 = vmatprep.subr.mxu0 0.0
    %468 = vmatpush1.msra.mxu0 0.0
    %469 = vmatprep.subr.mxu0 0.0
    %470 = vmatpush1.msra.mxu0 0.0
    %471 = vmatprep.subr.mxu0 0.0
    %472 = vmatpush1.msra.mxu0 0.0
    %473 = vmatprep.subr.mxu0 0.0
    %474 = vmatpush1.msra.mxu0 0.0
    %475 = vmatprep.subr.mxu0 0.0
    %476 = vmatpush1.msra.mxu0 0.0
    %477 = vmatprep.subr.mxu0 0.0
    %478 = vmatpush1.msra.mxu0 0.0
    %479 = vmatprep.mubr.f32.mxu0 0.0
    %480 = vmatmul.mubr.f32.gmra.mrb[0].mxu0 %v413
    %v481 = vpop.f32.mrb[0].mxu0
    %v482 = vadd.f32 0.0, %v481
    %v483 = vpop.f32.mrb[0].mxu0
    %484 = vdwg.mxu0
    %v486 = vsel %vm265, %v156, 0
    %488 = vmatprep.subr.mxu0 0.0
    %489 = vmatpush1.msra.mxu0 %v262
    %490 = vmatprep.subr.mxu0 0.0
    %491 = vmatpush1.msra.mxu0 0.0
    %492 = vmatprep.subr.mxu0 0.0
    %493 = vmatpush1.msra.mxu0 0.0
    %494 = vmatprep.subr.mxu0 0.0
    %495 = vmatpush1.msra.mxu0 0.0
    %496 = vmatprep.subr.mxu0 0.0
    %497 = vmatpush1.msra.mxu0 0.0
    %498 = vmatprep.subr.mxu0 0.0
    %499 = vmatpush1.msra.mxu0 0.0
    %500 = vmatprep.subr.mxu0 0.0
    %501 = vmatpush1.msra.mxu0 0.0
    %502 = vmatprep.subr.mxu0 0.0
    %503 = vmatpush1.msra.mxu0 0.0
    %504 = vmatprep.subr.mxu0 0.0
    %505 = vmatpush1.msra.mxu0 0.0
    %506 = vmatprep.subr.mxu0 0.0
    %507 = vmatpush1.msra.mxu0 0.0
    %508 = vmatprep.subr.mxu0 0.0
    %509 = vmatpush1.msra.mxu0 0.0
    %510 = vmatprep.subr.mxu0 0.0
    %511 = vmatpush1.msra.mxu0 0.0
    %512 = vmatprep.subr.mxu0 0.0
    %513 = vmatpush1.msra.mxu0 0.0
    %514 = vmatprep.subr.mxu0 0.0
    %515 = vmatpush1.msra.mxu0 0.0
    %516 = vmatprep.subr.mxu0 0.0
    %517 = vmatpush1.msra.mxu0 0.0
    %518 = vmatprep.subr.mxu0 0.0
    %519 = vmatpush1.msra.mxu0 0.0
    %520 = vmatprep.subr.mxu0 0.0
    %521 = vmatpush1.msra.mxu0 0.0
    %522 = vmatprep.subr.mxu0 0.0
    %523 = vmatpush1.msra.mxu0 0.0
    %524 = vmatprep.subr.mxu0 0.0
    %525 = vmatpush1.msra.mxu0 0.0
    %526 = vmatprep.subr.mxu0 0.0
    %527 = vmatpush1.msra.mxu0 0.0
    %528 = vmatprep.subr.mxu0 0.0
    %529 = vmatpush1.msra.mxu0 0.0
    %530 = vmatprep.subr.mxu0 0.0
    %531 = vmatpush1.msra.mxu0 0.0
    %532 = vmatprep.subr.mxu0 0.0
    %533 = vmatpush1.msra.mxu0 0.0
    %534 = vmatprep.subr.mxu0 0.0
    %535 = vmatpush1.msra.mxu0 0.0
    %536 = vmatprep.subr.mxu0 0.0
    %537 = vmatpush1.msra.mxu0 0.0
    %538 = vmatprep.subr.mxu0 0.0
    %539 = vmatpush1.msra.mxu0 0.0
    %540 = vmatprep.subr.mxu0 0.0
    %541 = vmatpush1.msra.mxu0 0.0
    %542 = vmatprep.subr.mxu0 0.0
    %543 = vmatpush1.msra.mxu0 0.0
    %544 = vmatprep.subr.mxu0 0.0
    %545 = vmatpush1.msra.mxu0 0.0
    %546 = vmatprep.subr.mxu0 0.0
    %547 = vmatpush1.msra.mxu0 0.0
    %548 = vmatprep.subr.mxu0 0.0
    %549 = vmatpush1.msra.mxu0 0.0
    %550 = vmatprep.subr.mxu0 0.0
    %551 = vmatpush1.msra.mxu0 0.0
    %552 = vmatprep.mubr.f32.mxu0 0.0
    %553 = vmatmul.mubr.f32.gmra.mrb[0].mxu0 %v486
    %v554 = vpop.f32.mrb[0].mxu0
    %v555 = vadd.f32 0.0, %v554
    %v556 = vpop.f32.mrb[0].mxu0
    %557 = vdwg.mxu0
    %v559 = vlaneseq
    %v560 = vshrl.u32 %v559, 7
    %v561 = vsub.s32 0, %v560
    %v562 = vrot.slane %v162, %v561
    %v564 = vadd.f32 %v336, %v562
    %v565 = vadd.f32 %v409, %v562
    %v566 = vadd.f32 %v482, %v562
    %v567 = vadd.f32 %v555, %v562
    %v568 = vmax.f32 %v564, 0.0
    %v569 = vmax.f32 %v565, 0.0
    %v570 = vmax.f32 %v566, 0.0
    %v571 = vmax.f32 %v567, 0.0
    %vm572 = vcmask 261120
    %v573 = vsel %vm572, %v568, 0.0
    %v574 = vsel %vm572, %v569, 0.0
    %v575 = vadd.f32 %v573, %v574
    %v576 = vsel %vm572, %v570, 0.0
    %v577 = vadd.f32 %v575, %v576
    %v578 = vsel %vm572, %v571, 0.0
    %v579 = vadd.f32 %v577, %v578
    %v580 = vrot.slane %v579, 4
    %v581 = vadd.f32 %v579, %v580
    %v582 = vrot.slane %v581, 2
    %v583 = vadd.f32 %v581, %v582
    %v584 = vrot.slane %v583, 1
    %v585 = vadd.f32 %v583, %v584
    %v586 = vrcp.pop 32.0
    %v587 = vmul.f32 %v585, %v586
    %v588 = vsub.f32 %v568, %v587
    %v589 = vsub.f32 %v569, %v587
    %v590 = vsub.f32 %v570, %v587
    %v591 = vsub.f32 %v571, %v587
    %v592 = vmul.f32 %v588, %v588
    %v593 = vmul.f32 %v589, %v589
    %v594 = vmul.f32 %v590, %v590
    %v595 = vmul.f32 %v591, %v591
    %v596 = vsel %vm572, %v592, 0.0
    %v597 = vsel %vm572, %v593, 0.0
    %v598 = vadd.f32 %v596, %v597
    %v599 = vsel %vm572, %v594, 0.0
    %v600 = vadd.f32 %v598, %v599
    %v601 = vsel %vm572, %v595, 0.0
    %v602 = vadd.f32 %v600, %v601
    %v603 = vrot.slane %v602, 4
    %v604 = vadd.f32 %v602, %v603
    %v605 = vrot.slane %v604, 2
    %v606 = vadd.f32 %v604, %v605
    %v607 = vrot.slane %v606, 1
    %v608 = vadd.f32 %v606, %v607
    %v609 = vmul.f32 %v608, %v586
    %v610 = vadd.f32 %v609, 1e-05
    %v611 = vrsqrt.pop %v610
    %v612 = vmul.f32 %v588, %v611
    %v613 = vmul.f32 %v589, %v611
    %v614 = vmul.f32 %v590, %v611
    %v615 = vmul.f32 %v591, %v611
    %v616 = vld [vmem:[#allocation8] sm:$0xff]
    %v617 = vld [vmem:[#allocation8 + $0x8] sm:$0xff]
    %v618 = vld [vmem:[#allocation8 + $0x10] sm:$0xff]
    %v619 = vld [vmem:[#allocation8 + $0x18] sm:$0xff]
    %v620 = vld [vmem:[#allocation10] sm:$0x1]
    %v622 = vsel %vm572, %v612, 0
    %v625 = vsel %vm572, %v613, 0
    %v628 = vsel %vm572, %v614, 0
    %v631 = vsel %vm572, %v615, 0
    %633 = vmatprep.subr.mxu0 0.0
    %634 = vmatpush1.msra.mxu0 %v616
    %635 = vmatprep.subr.mxu0 0.0
    %636 = vmatpush1.msra.mxu0 %v617
    %637 = vmatprep.subr.mxu0 0.0
    %638 = vmatpush1.msra.mxu0 %v618
    %639 = vmatprep.subr.mxu0 0.0
    %640 = vmatpush1.msra.mxu0 %v619
    %641 = vmatprep.subr.mxu0 0.0
    %642 = vmatpush1.msra.mxu0 0.0
    %643 = vmatprep.subr.mxu0 0.0
    %644 = vmatpush1.msra.mxu0 0.0
    %645 = vmatprep.subr.mxu0 0.0
    %646 = vmatpush1.msra.mxu0 0.0
    %647 = vmatprep.subr.mxu0 0.0
    %648 = vmatpush1.msra.mxu0 0.0
    %649 = vmatprep.subr.mxu0 0.0
    %650 = vmatpush1.msra.mxu0 0.0
    %651 = vmatprep.subr.mxu0 0.0
    %652 = vmatpush1.msra.mxu0 0.0
    %653 = vmatprep.subr.mxu0 0.0
    %654 = vmatpush1.msra.mxu0 0.0
    %655 = vmatprep.subr.mxu0 0.0
    %656 = vmatpush1.msra.mxu0 0.0
    %657 = vmatprep.subr.mxu0 0.0
    %658 = vmatpush1.msra.mxu0 0.0
    %659 = vmatprep.subr.mxu0 0.0
    %660 = vmatpush1.msra.mxu0 0.0
    %661 = vmatprep.subr.mxu0 0.0
    %662 = vmatpush1.msra.mxu0 0.0
    %663 = vmatprep.subr.mxu0 0.0
    %664 = vmatpush1.msra.mxu0 0.0
    %665 = vmatprep.subr.mxu0 0.0
    %666 = vmatpush1.msra.mxu0 0.0
    %667 = vmatprep.subr.mxu0 0.0
    %668 = vmatpush1.msra.mxu0 0.0
    %669 = vmatprep.subr.mxu0 0.0
    %670 = vmatpush1.msra.mxu0 0.0
    %671 = vmatprep.subr.mxu0 0.0
    %672 = vmatpush1.msra.mxu0 0.0
    %673 = vmatprep.subr.mxu0 0.0
    %674 = vmatpush1.msra.mxu0 0.0
    %675 = vmatprep.subr.mxu0 0.0
    %676 = vmatpush1.msra.mxu0 0.0
    %677 = vmatprep.subr.mxu0 0.0
    %678 = vmatpush1.msra.mxu0 0.0
    %679 = vmatprep.subr.mxu0 0.0
    %680 = vmatpush1.msra.mxu0 0.0
    %681 = vmatprep.subr.mxu0 0.0
    %682 = vmatpush1.msra.mxu0 0.0
    %683 = vmatprep.subr.mxu0 0.0
    %684 = vmatpush1.msra.mxu0 0.0
    %685 = vmatprep.subr.mxu0 0.0
    %686 = vmatpush1.msra.mxu0 0.0
    %687 = vmatprep.subr.mxu0 0.0
    %688 = vmatpush1.msra.mxu0 0.0
    %689 = vmatprep.subr.mxu0 0.0
    %690 = vmatpush1.msra.mxu0 0.0
    %691 = vmatprep.subr.mxu0 0.0
    %692 = vmatpush1.msra.mxu0 0.0
    %693 = vmatprep.subr.mxu0 0.0
    %694 = vmatpush1.msra.mxu0 0.0
    %695 = vmatprep.subr.mxu0 0.0
    %696 = vmatpush1.msra.mxu0 0.0
    %697 = vmatprep.mubr.f32.mxu0 0.0
    %698 = vmatmul.mubr.f32.gmra.mrb[0].mxu0 %v622
    %v699 = vpop.f32.mrb[0].mxu0
    %v700 = vadd.f32 0.0, %v699
    %v701 = vpop.f32.mrb[0].mxu0
    %702 = vmatprep.mubr.f32.mxu0 0.0
    %703 = vmatmul.mubr.f32.gmra.mrb[0].mxu0 %v625
    %v704 = vpop.f32.mrb[0].mxu0
    %v705 = vadd.f32 0.0, %v704
    %v706 = vpop.f32.mrb[0].mxu0
    %707 = vmatprep.mubr.f32.mxu0 0.0
    %708 = vmatmul.mubr.f32.gmra.mrb[0].mxu0 %v628
    %v709 = vpop.f32.mrb[0].mxu0
    %v710 = vadd.f32 0.0, %v709
    %v711 = vpop.f32.mrb[0].mxu0
    %712 = vmatprep.mubr.f32.mxu0 0.0
    %713 = vmatmul.mubr.f32.gmra.mrb[0].mxu0 %v631
    %v714 = vpop.f32.mrb[0].mxu0
    %v715 = vadd.f32 0.0, %v714
    %v716 = vpop.f32.mrb[0].mxu0
    %717 = vdwg.mxu0
    %718 = vmatprep.subr.mxu0 0.0
    %719 = vmatpush1.msra.mxu0 %v700
    %720 = vmatprep.subr.mxu0 0.0
    %721 = vmatpush1.msra.mxu0 0.0
    %722 = vmatprep.subr.mxu0 0.0
    %723 = vmatpush1.msra.mxu0 0.0
    %724 = vmatprep.subr.mxu0 0.0
    %725 = vmatpush1.msra.mxu0 0.0
    %726 = vmatprep.subr.mxu0 0.0
    %727 = vmatpush1.msra.mxu0 0.0
    %728 = vmatprep.subr.mxu0 0.0
    %729 = vmatpush1.msra.mxu0 0.0
    %730 = vmatprep.subr.mxu0 0.0
    %731 = vmatpush1.msra.mxu0 0.0
    %732 = vmatprep.subr.mxu0 0.0
    %733 = vmatpush1.msra.mxu0 0.0
    %734 = vmatprep.subr.mxu0 0.0
    %735 = vmatpush1.msra.mxu0 0.0
    %736 = vmatprep.subr.mxu0 0.0
    %737 = vmatpush1.msra.mxu0 0.0
    %738 = vmatprep.subr.mxu0 0.0
    %739 = vmatpush1.msra.mxu0 0.0
    %740 = vmatprep.subr.mxu0 0.0
    %741 = vmatpush1.msra.mxu0 0.0
    %742 = vmatprep.subr.mxu0 0.0
    %743 = vmatpush1.msra.mxu0 0.0
    %744 = vmatprep.subr.mxu0 0.0
    %745 = vmatpush1.msra.mxu0 0.0
    %746 = vmatprep.subr.mxu0 0.0
    %747 = vmatpush1.msra.mxu0 0.0
    %748 = vmatprep.subr.mxu0 0.0
    %749 = vmatpush1.msra.mxu0 0.0
    %750 = vmatprep.subr.mxu0 0.0
    %751 = vmatpush1.msra.mxu0 0.0
    %752 = vmatprep.subr.mxu0 0.0
    %753 = vmatpush1.msra.mxu0 0.0
    %754 = vmatprep.subr.mxu0 0.0
    %755 = vmatpush1.msra.mxu0 0.0
    %756 = vmatprep.subr.mxu0 0.0
    %757 = vmatpush1.msra.mxu0 0.0
    %758 = vmatprep.subr.mxu0 0.0
    %759 = vmatpush1.msra.mxu0 0.0
    %760 = vmatprep.subr.mxu0 0.0
    %761 = vmatpush1.msra.mxu0 0.0
    %762 = vmatprep.subr.mxu0 0.0
    %763 = vmatpush1.msra.mxu0 0.0
    %764 = vmatprep.subr.mxu0 0.0
    %765 = vmatpush1.msra.mxu0 0.0
    %766 = vmatprep.subr.mxu0 0.0
    %767 = vmatpush1.msra.mxu0 0.0
    %768 = vmatprep.subr.mxu0 0.0
    %769 = vmatpush1.msra.mxu0 0.0
    %770 = vmatprep.subr.mxu0 0.0
    %771 = vmatpush1.msra.mxu0 0.0
    %772 = vmatprep.subr.mxu0 0.0
    %773 = vmatpush1.msra.mxu0 0.0
    %774 = vmatprep.subr.mxu0 0.0
    %775 = vmatpush1.msra.mxu0 0.0
    %776 = vmatprep.subr.mxu0 0.0
    %777 = vmatpush1.msra.mxu0 0.0
    %778 = vmatprep.subr.mxu0 0.0
    %779 = vmatpush1.msra.mxu0 0.0
    %780 = vmatprep.subr.mxu0 0.0
    %781 = vmatpush1.msra.mxu0 0.0
    %782 = vmatprep.mubr.f32.mxu0 0.0
    %783 = vmatmul.mubr.f32.gmra.mrb[0].mxu0 %v267
    %v784 = vpop.f32.mrb[0].mxu0
    %v785 = vadd.f32 0.0, %v784
    %v786 = vpop.f32.mrb[0].mxu0
    %787 = vdwg.mxu0
    %788 = vmatprep.subr.mxu0 0.0
    %789 = vmatpush1.msra.mxu0 %v705
    %790 = vmatprep.subr.mxu0 0.0
    %791 = vmatpush1.msra.mxu0 0.0
    %792 = vmatprep.subr.mxu0 0.0
    %793 = vmatpush1.msra.mxu0 0.0
    %794 = vmatprep.subr.mxu0 0.0
    %795 = vmatpush1.msra.mxu0 0.0
    %796 = vmatprep.subr.mxu0 0.0
    %797 = vmatpush1.msra.mxu0 0.0
    %798 = vmatprep.subr.mxu0 0.0
    %799 = vmatpush1.msra.mxu0 0.0
    %800 = vmatprep.subr.mxu0 0.0
    %801 = vmatpush1.msra.mxu0 0.0
    %802 = vmatprep.subr.mxu0 0.0
    %803 = vmatpush1.msra.mxu0 0.0
    %804 = vmatprep.subr.mxu0 0.0
    %805 = vmatpush1.msra.mxu0 0.0
    %806 = vmatprep.subr.mxu0 0.0
    %807 = vmatpush1.msra.mxu0 0.0
    %808 = vmatprep.subr.mxu0 0.0
    %809 = vmatpush1.msra.mxu0 0.0
    %810 = vmatprep.subr.mxu0 0.0
    %811 = vmatpush1.msra.mxu0 0.0
    %812 = vmatprep.subr.mxu0 0.0
    %813 = vmatpush1.msra.mxu0 0.0
    %814 = vmatprep.subr.mxu0 0.0
    %815 = vmatpush1.msra.mxu0 0.0
    %816 = vmatprep.subr.mxu0 0.0
    %817 = vmatpush1.msra.mxu0 0.0
    %818 = vmatprep.subr.mxu0 0.0
    %819 = vmatpush1.msra.mxu0 0.0
    %820 = vmatprep.subr.mxu0 0.0
    %821 = vmatpush1.msra.mxu0 0.0
    %822 = vmatprep.subr.mxu0 0.0
    %823 = vmatpush1.msra.mxu0 0.0
    %824 = vmatprep.subr.mxu0 0.0
    %825 = vmatpush1.msra.mxu0 0.0
    %826 = vmatprep.subr.mxu0 0.0
    %827 = vmatpush1.msra.mxu0 0.0
    %828 = vmatprep.subr.mxu0 0.0
    %829 = vmatpush1.msra.mxu0 0.0
    %830 = vmatprep.subr.mxu0 0.0
    %831 = vmatpush1.msra.mxu0 0.0
    %832 = vmatprep.subr.mxu0 0.0
    %833 = vmatpush1.msra.mxu0 0.0
    %834 = vmatprep.subr.mxu0 0.0
    %835 = vmatpush1.msra.mxu0 0.0
    %836 = vmatprep.subr.mxu0 0.0
    %837 = vmatpush1.msra.mxu0 0.0
    %838 = vmatprep.subr.mxu0 0.0
    %839 = vmatpush1.msra.mxu0 0.0
    %840 = vmatprep.subr.mxu0 0.0
    %841 = vmatpush1.msra.mxu0 0.0
    %842 = vmatprep.subr.mxu0 0.0
    %843 = vmatpush1.msra.mxu0 0.0
    %844 = vmatprep.subr.mxu0 0.0
    %845 = vmatpush1.msra.mxu0 0.0
    %846 = vmatprep.subr.mxu0 0.0
    %847 = vmatpush1.msra.mxu0 0.0
    %848 = vmatprep.subr.mxu0 0.0
    %849 = vmatpush1.msra.mxu0 0.0
    %850 = vmatprep.subr.mxu0 0.0
    %851 = vmatpush1.msra.mxu0 0.0
    %852 = vmatprep.mubr.f32.mxu0 0.0
    %853 = vmatmul.mubr.f32.gmra.mrb[0].mxu0 %v340
    %v854 = vpop.f32.mrb[0].mxu0
    %v855 = vadd.f32 0.0, %v854
    %v856 = vpop.f32.mrb[0].mxu0
    %857 = vdwg.mxu0
    %858 = vmatprep.subr.mxu0 0.0
    %859 = vmatpush1.msra.mxu0 %v710
    %860 = vmatprep.subr.mxu0 0.0
    %861 = vmatpush1.msra.mxu0 0.0
    %862 = vmatprep.subr.mxu0 0.0
    %863 = vmatpush1.msra.mxu0 0.0
    %864 = vmatprep.subr.mxu0 0.0
    %865 = vmatpush1.msra.mxu0 0.0
    %866 = vmatprep.subr.mxu0 0.0
    %867 = vmatpush1.msra.mxu0 0.0
    %868 = vmatprep.subr.mxu0 0.0
    %869 = vmatpush1.msra.mxu0 0.0
    %870 = vmatprep.subr.mxu0 0.0
    %871 = vmatpush1.msra.mxu0 0.0
    %872 = vmatprep.subr.mxu0 0.0
    %873 = vmatpush1.msra.mxu0 0.0
    %874 = vmatprep.subr.mxu0 0.0
    %875 = vmatpush1.msra.mxu0 0.0
    %876 = vmatprep.subr.mxu0 0.0
    %877 = vmatpush1.msra.mxu0 0.0
    %878 = vmatprep.subr.mxu0 0.0
    %879 = vmatpush1.msra.mxu0 0.0
    %880 = vmatprep.subr.mxu0 0.0
    %881 = vmatpush1.msra.mxu0 0.0
    %882 = vmatprep.subr.mxu0 0.0
    %883 = vmatpush1.msra.mxu0 0.0
    %884 = vmatprep.subr.mxu0 0.0
    %885 = vmatpush1.msra.mxu0 0.0
    %886 = vmatprep.subr.mxu0 0.0
    %887 = vmatpush1.msra.mxu0 0.0
    %888 = vmatprep.subr.mxu0 0.0
    %889 = vmatpush1.msra.mxu0 0.0
    %890 = vmatprep.subr.mxu0 0.0
    %891 = vmatpush1.msra.mxu0 0.0
    %892 = vmatprep.subr.mxu0 0.0
    %893 = vmatpush1.msra.mxu0 0.0
    %894 = vmatprep.subr.mxu0 0.0
    %895 = vmatpush1.msra.mxu0 0.0
    %896 = vmatprep.subr.mxu0 0.0
    %897 = vmatpush1.msra.mxu0 0.0
    %898 = vmatprep.subr.mxu0 0.0
    %899 = vmatpush1.msra.mxu0 0.0
    %900 = vmatprep.subr.mxu0 0.0
    %901 = vmatpush1.msra.mxu0 0.0
    %902 = vmatprep.subr.mxu0 0.0
    %903 = vmatpush1.msra.mxu0 0.0
    %904 = vmatprep.subr.mxu0 0.0
    %905 = vmatpush1.msra.mxu0 0.0
    %906 = vmatprep.subr.mxu0 0.0
    %907 = vmatpush1.msra.mxu0 0.0
    %908 = vmatprep.subr.mxu0 0.0
    %909 = vmatpush1.msra.mxu0 0.0
    %910 = vmatprep.subr.mxu0 0.0
    %911 = vmatpush1.msra.mxu0 0.0
    %912 = vmatprep.subr.mxu0 0.0
    %913 = vmatpush1.msra.mxu0 0.0
    %914 = vmatprep.subr.mxu0 0.0
    %915 = vmatpush1.msra.mxu0 0.0
    %916 = vmatprep.subr.mxu0 0.0
    %917 = vmatpush1.msra.mxu0 0.0
    %918 = vmatprep.subr.mxu0 0.0
    %919 = vmatpush1.msra.mxu0 0.0
    %920 = vmatprep.subr.mxu0 0.0
    %921 = vmatpush1.msra.mxu0 0.0
    %922 = vmatprep.mubr.f32.mxu0 0.0
    %923 = vmatmul.mubr.f32.gmra.mrb[0].mxu0 %v413
    %v924 = vpop.f32.mrb[0].mxu0
    %v925 = vadd.f32 0.0, %v924
    %v926 = vpop.f32.mrb[0].mxu0
    %927 = vdwg.mxu0
    %928 = vmatprep.subr.mxu0 0.0
    %929 = vmatpush1.msra.mxu0 %v715
    %930 = vmatprep.subr.mxu0 0.0
    %931 = vmatpush1.msra.mxu0 0.0
    %932 = vmatprep.subr.mxu0 0.0
    %933 = vmatpush1.msra.mxu0 0.0
    %934 = vmatprep.subr.mxu0 0.0
    %935 = vmatpush1.msra.mxu0 0.0
    %936 = vmatprep.subr.mxu0 0.0
    %937 = vmatpush1.msra.mxu0 0.0
    %938 = vmatprep.subr.mxu0 0.0
    %939 = vmatpush1.msra.mxu0 0.0
    %940 = vmatprep.subr.mxu0 0.0
    %941 = vmatpush1.msra.mxu0 0.0
    %942 = vmatprep.subr.mxu0 0.0
    %943 = vmatpush1.msra.mxu0 0.0
    %944 = vmatprep.subr.mxu0 0.0
    %945 = vmatpush1.msra.mxu0 0.0
    %946 = vmatprep.subr.mxu0 0.0
    %947 = vmatpush1.msra.mxu0 0.0
    %948 = vmatprep.subr.mxu0 0.0
    %949 = vmatpush1.msra.mxu0 0.0
    %950 = vmatprep.subr.mxu0 0.0
    %951 = vmatpush1.msra.mxu0 0.0
    %952 = vmatprep.subr.mxu0 0.0
    %953 = vmatpush1.msra.mxu0 0.0
    %954 = vmatprep.subr.mxu0 0.0
    %955 = vmatpush1.msra.mxu0 0.0
    %956 = vmatprep.subr.mxu0 0.0
    %957 = vmatpush1.msra.mxu0 0.0
    %958 = vmatprep.subr.mxu0 0.0
    %959 = vmatpush1.msra.mxu0 0.0
    %960 = vmatprep.subr.mxu0 0.0
    %961 = vmatpush1.msra.mxu0 0.0
    %962 = vmatprep.subr.mxu0 0.0
    %963 = vmatpush1.msra.mxu0 0.0
    %964 = vmatprep.subr.mxu0 0.0
    %965 = vmatpush1.msra.mxu0 0.0
    %966 = vmatprep.subr.mxu0 0.0
    %967 = vmatpush1.msra.mxu0 0.0
    %968 = vmatprep.subr.mxu0 0.0
    %969 = vmatpush1.msra.mxu0 0.0
    %970 = vmatprep.subr.mxu0 0.0
    %971 = vmatpush1.msra.mxu0 0.0
    %972 = vmatprep.subr.mxu0 0.0
    %973 = vmatpush1.msra.mxu0 0.0
    %974 = vmatprep.subr.mxu0 0.0
    %975 = vmatpush1.msra.mxu0 0.0
    %976 = vmatprep.subr.mxu0 0.0
    %977 = vmatpush1.msra.mxu0 0.0
    %978 = vmatprep.subr.mxu0 0.0
    %979 = vmatpush1.msra.mxu0 0.0
    %980 = vmatprep.subr.mxu0 0.0
    %981 = vmatpush1.msra.mxu0 0.0
    %982 = vmatprep.subr.mxu0 0.0
    %983 = vmatpush1.msra.mxu0 0.0
    %984 = vmatprep.subr.mxu0 0.0
    %985 = vmatpush1.msra.mxu0 0.0
    %986 = vmatprep.subr.mxu0 0.0
    %987 = vmatpush1.msra.mxu0 0.0
    %988 = vmatprep.subr.mxu0 0.0
    %989 = vmatpush1.msra.mxu0 0.0
    %990 = vmatprep.subr.mxu0 0.0
    %991 = vmatpush1.msra.mxu0 0.0
    %992 = vmatprep.mubr.f32.mxu0 0.0
    %993 = vmatmul.mubr.f32.gmra.mrb[0].mxu0 %v486
    %v994 = vpop.f32.mrb[0].mxu0
    %v995 = vadd.f32 0.0, %v994
    %v996 = vpop.f32.mrb[0].mxu0
    %997 = vdwg.mxu0
    %v999 = vlaneseq
    %v1000 = vshrl.u32 %v999, 7
    %v1001 = vsub.s32 0, %v1000
    %v1002 = vrot.slane %v620, %v1001
    %v1004 = vadd.f32 %v785, %v1002
    %v1005 = vadd.f32 %v855, %v1002
    %v1006 = vadd.f32 %v925, %v1002
    %v1007 = vadd.f32 %v995, %v1002
    %v1008 = vmax.f32 %v1004, 0.0
    %v1009 = vmax.f32 %v1005, 0.0
    %v1010 = vmax.f32 %v1006, 0.0
    %v1011 = vmax.f32 %v1007, 0.0
    %v1012 = vsel %vm572, %v1008, 0.0
    %v1013 = vsel %vm572, %v1009, 0.0
    %v1014 = vadd.f32 %v1012, %v1013
    %v1015 = vsel %vm572, %v1010, 0.0
    %v1016 = vadd.f32 %v1014, %v1015
    %v1017 = vsel %vm572, %v1011, 0.0
    %v1018 = vadd.f32 %v1016, %v1017
    %v1019 = vrot.slane %v1018, 4
    %v1020 = vadd.f32 %v1018, %v1019
    %v1021 = vrot.slane %v1020, 2
    %v1022 = vadd.f32 %v1020, %v1021
    %v1023 = vrot.slane %v1022, 1
    %v1024 = vadd.f32 %v1022, %v1023
    %v1025 = vmul.f32 %v1024, %v586
    %v1026 = vsub.f32 %v1008, %v1025
    %v1027 = vsub.f32 %v1009, %v1025
    %v1028 = vsub.f32 %v1010, %v1025
    %v1029 = vsub.f32 %v1011, %v1025
    %v1030 = vmul.f32 %v1026, %v1026
    %v1031 = vmul.f32 %v1027, %v1027
    %v1032 = vmul.f32 %v1028, %v1028
    %v1033 = vmul.f32 %v1029, %v1029
    %v1034 = vsel %vm572, %v1030, 0.0
    %v1035 = vsel %vm572, %v1031, 0.0
    %v1036 = vadd.f32 %v1034, %v1035
    %v1037 = vsel %vm572, %v1032, 0.0
    %v1038 = vadd.f32 %v1036, %v1037
    %v1039 = vsel %vm572, %v1033, 0.0
    %v1040 = vadd.f32 %v1038, %v1039
    %v1041 = vrot.slane %v1040, 4
    %v1042 = vadd.f32 %v1040, %v1041
    %v1043 = vrot.slane %v1042, 2
    %v1044 = vadd.f32 %v1042, %v1043
    %v1045 = vrot.slane %v1044, 1
    %v1046 = vadd.f32 %v1044, %v1045
    %v1047 = vmul.f32 %v1046, %v586
    %v1048 = vadd.f32 %v1047, 1e-05
    %v1049 = vrsqrt.pop %v1048
    %v1050 = vmul.f32 %v1026, %v1049
    %v1051 = vmul.f32 %v1027, %v1049
    %v1052 = vmul.f32 %v1028, %v1049
    %v1053 = vmul.f32 %v1029, %v1049
    %1058 = vrot.lane.b32.xlu0 %v1050, 32
    %v1059 = vpop.permute.xlu0 %1058
    %1060 = vrot.lane.b32.xlu0 %v1051, 32
    %v1061 = vpop.permute.xlu0 %1060
    %1062 = vrot.lane.b32.xlu0 %v1052, 32
    %v1063 = vpop.permute.xlu0 %1062
    %1064 = vrot.lane.b32.xlu0 %v1053, 32
    %v1065 = vpop.permute.xlu0 %1064
    %v1070 = vsel %vm572, %v612, %v1059
    %v1071 = vsel %vm572, %v613, %v1061
    %v1072 = vsel %vm572, %v614, %v1063
    %v1073 = vsel %vm572, %v615, %v1065
    %v1074 = vld [vmem:[%s7] sm:$0xff]
    %v1075 = vld [vmem:[%s7 + $0x8] sm:$0xff]
    %v1076 = vld [vmem:[%s7 + $0x10] sm:$0xff]
    %v1077 = vld [vmem:[%s7 + $0x18] sm:$0xff]
    %v1078 = vld [vmem:[%s7 + $0x20] sm:$0xff]
    %v1079 = vld [vmem:[%s7 + $0x28] sm:$0xff]
    %v1080 = vld [vmem:[%s7 + $0x30] sm:$0xff]
    %v1081 = vld [vmem:[%s7 + $0x38] sm:$0xff]
    %v1082 = vld [vmem:[#allocation13] sm:$0x1]
    %v1084 = vlaneseq
    %v1085 = vshrl.u32 %v1084, 7
    %v1086 = vsub.s32 0, %v1085
    %v1087 = vrot.slane %v1082, %v1086
    %vm1089 = vcmask 523264
    %v1091 = vsel %vm1089, %v1070, 0
    %v1094 = vsel %vm1089, %v1071, 0
    %v1097 = vsel %vm1089, %v1072, 0
    %v1100 = vsel %vm1089, %v1073, 0
    %1102 = vmatprep.subr.mxu0 0.0
    %1103 = vmatpush1.msra.mxu0 %v1074
    %1104 = vmatprep.subr.mxu0 0.0
    %1105 = vmatpush1.msra.mxu0 %v1075
    %1106 = vmatprep.subr.mxu0 0.0
    %1107 = vmatpush1.msra.mxu0 %v1076
    %1108 = vmatprep.subr.mxu0 0.0
    %1109 = vmatpush1.msra.mxu0 %v1077
    %1110 = vmatprep.subr.mxu0 0.0
    %1111 = vmatpush1.msra.mxu0 %v1078
    %1112 = vmatprep.subr.mxu0 0.0
    %1113 = vmatpush1.msra.mxu0 %v1079
    %1114 = vmatprep.subr.mxu0 0.0
    %1115 = vmatpush1.msra.mxu0 %v1080
    %1116 = vmatprep.subr.mxu0 0.0
    %1117 = vmatpush1.msra.mxu0 %v1081
    %1118 = vmatprep.subr.mxu0 0.0
    %1119 = vmatpush1.msra.mxu0 0.0
    %1120 = vmatprep.subr.mxu0 0.0
    %1121 = vmatpush1.msra.mxu0 0.0
    %1122 = vmatprep.subr.mxu0 0.0
    %1123 = vmatpush1.msra.mxu0 0.0
    %1124 = vmatprep.subr.mxu0 0.0
    %1125 = vmatpush1.msra.mxu0 0.0
    %1126 = vmatprep.subr.mxu0 0.0
    %1127 = vmatpush1.msra.mxu0 0.0
    %1128 = vmatprep.subr.mxu0 0.0
    %1129 = vmatpush1.msra.mxu0 0.0
    %1130 = vmatprep.subr.mxu0 0.0
    %1131 = vmatpush1.msra.mxu0 0.0
    %1132 = vmatprep.subr.mxu0 0.0
    %1133 = vmatpush1.msra.mxu0 0.0
    %1134 = vmatprep.subr.mxu0 0.0
    %1135 = vmatpush1.msra.mxu0 0.0
    %1136 = vmatprep.subr.mxu0 0.0
    %1137 = vmatpush1.msra.mxu0 0.0
    %1138 = vmatprep.subr.mxu0 0.0
    %1139 = vmatpush1.msra.mxu0 0.0
    %1140 = vmatprep.subr.mxu0 0.0
    %1141 = vmatpush1.msra.mxu0 0.0
    %1142 = vmatprep.subr.mxu0 0.0
    %1143 = vmatpush1.msra.mxu0 0.0
    %1144 = vmatprep.subr.mxu0 0.0
    %1145 = vmatpush1.msra.mxu0 0.0
    %1146 = vmatprep.subr.mxu0 0.0
    %1147 = vmatpush1.msra.mxu0 0.0
    %1148 = vmatprep.subr.mxu0 0.0
    %1149 = vmatpush1.msra.mxu0 0.0
    %1150 = vmatprep.subr.mxu0 0.0
    %1151 = vmatpush1.msra.mxu0 0.0
    %1152 = vmatprep.subr.mxu0 0.0
    %1153 = vmatpush1.msra.mxu0 0.0
    %1154 = vmatprep.subr.mxu0 0.0
    %1155 = vmatpush1.msra.mxu0 0.0
    %1156 = vmatprep.subr.mxu0 0.0
    %1157 = vmatpush1.msra.mxu0 0.0
    %1158 = vmatprep.subr.mxu0 0.0
    %1159 = vmatpush1.msra.mxu0 0.0
    %1160 = vmatprep.subr.mxu0 0.0
    %1161 = vmatpush1.msra.mxu0 0.0
    %1162 = vmatprep.subr.mxu0 0.0
    %1163 = vmatpush1.msra.mxu0 0.0
    %1164 = vmatprep.subr.mxu0 0.0
    %1165 = vmatpush1.msra.mxu0 0.0
    %1166 = vmatprep.mubr.f32.mxu0 0.0
    %1167 = vmatmul.mubr.f32.gmra.mrb[0].mxu0 %v1091
    %v1168 = vpop.f32.mrb[0].mxu0
    %v1169 = vadd.f32 %v1087, %v1168
    %v1170 = vpop.f32.mrb[0].mxu0
    %1171 = vmatprep.mubr.f32.mxu0 0.0
    %1172 = vmatmul.mubr.f32.gmra.mrb[0].mxu0 %v1094
    %v1173 = vpop.f32.mrb[0].mxu0
    %v1174 = vadd.f32 %v1087, %v1173
    %v1175 = vpop.f32.mrb[0].mxu0
    %1176 = vmatprep.mubr.f32.mxu0 0.0
    %1177 = vmatmul.mubr.f32.gmra.mrb[0].mxu0 %v1097
    %v1178 = vpop.f32.mrb[0].mxu0
    %v1179 = vadd.f32 %v1087, %v1178
    %v1180 = vpop.f32.mrb[0].mxu0
    %1181 = vmatprep.mubr.f32.mxu0 0.0
    %1182 = vmatmul.mubr.f32.gmra.mrb[0].mxu0 %v1100
    %v1183 = vpop.f32.mrb[0].mxu0
    %v1184 = vadd.f32 %v1087, %v1183
    %v1185 = vpop.f32.mrb[0].mxu0
    %1186 = vdwg.mxu0
    %v1187 = vld [vmem:[#allocation11] sm:$0xff]
    %v1188 = vld [vmem:[#allocation11 + $0x8] sm:$0xff]
    %v1189 = vld [vmem:[#allocation11 + $0x10] sm:$0xff]
    %v1190 = vld [vmem:[#allocation11 + $0x18] sm:$0xff]
    %v1191 = vld [vmem:[%s10] sm:$0xff]
    %v1192 = vld [vmem:[%s10 + $0x8] sm:$0xff]
    %v1193 = vld [vmem:[%s10 + $0x10] sm:$0xff]
    %v1194 = vld [vmem:[%s10 + $0x18] sm:$0xff]
    %v1195 = vld [vmem:[%s10 + $0x20] sm:$0xff]
    %v1196 = vld [vmem:[%s10 + $0x28] sm:$0xff]
    %v1197 = vld [vmem:[%s10 + $0x30] sm:$0xff]
    %v1198 = vld [vmem:[%s10 + $0x38] sm:$0xff]
    %v1199 = vld [vmem:[#allocation14] sm:$0x1]
    %v1201 = vsel %vm572, 0.0, 0
    %1203 = vmatprep.subr.mxu0 0.0
    %1204 = vmatpush1.msra.mxu0 %v1187
    %1205 = vmatprep.subr.mxu0 0.0
    %1206 = vmatpush1.msra.mxu0 %v1188
    %1207 = vmatprep.subr.mxu0 0.0
    %1208 = vmatpush1.msra.mxu0 %v1189
    %1209 = vmatprep.subr.mxu0 0.0
    %1210 = vmatpush1.msra.mxu0 %v1190
    %1211 = vmatprep.subr.mxu0 0.0
    %1212 = vmatpush1.msra.mxu0 0.0
    %1213 = vmatprep.subr.mxu0 0.0
    %1214 = vmatpush1.msra.mxu0 0.0
    %1215 = vmatprep.subr.mxu0 0.0
    %1216 = vmatpush1.msra.mxu0 0.0
    %1217 = vmatprep.subr.mxu0 0.0
    %1218 = vmatpush1.msra.mxu0 0.0
    %1219 = vmatprep.subr.mxu0 0.0
    %1220 = vmatpush1.msra.mxu0 0.0
    %1221 = vmatprep.subr.mxu0 0.0
    %1222 = vmatpush1.msra.mxu0 0.0
    %1223 = vmatprep.subr.mxu0 0.0
    %1224 = vmatpush1.msra.mxu0 0.0
    %1225 = vmatprep.subr.mxu0 0.0
    %1226 = vmatpush1.msra.mxu0 0.0
    %1227 = vmatprep.subr.mxu0 0.0
    %1228 = vmatpush1.msra.mxu0 0.0
    %1229 = vmatprep.subr.mxu0 0.0
    %1230 = vmatpush1.msra.mxu0 0.0
    %1231 = vmatprep.subr.mxu0 0.0
    %1232 = vmatpush1.msra.mxu0 0.0
    %1233 = vmatprep.subr.mxu0 0.0
    %1234 = vmatpush1.msra.mxu0 0.0
    %1235 = vmatprep.subr.mxu0 0.0
    %1236 = vmatpush1.msra.mxu0 0.0
    %1237 = vmatprep.subr.mxu0 0.0
    %1238 = vmatpush1.msra.mxu0 0.0
    %1239 = vmatprep.subr.mxu0 0.0
    %1240 = vmatpush1.msra.mxu0 0.0
    %1241 = vmatprep.subr.mxu0 0.0
    %1242 = vmatpush1.msra.mxu0 0.0
    %1243 = vmatprep.subr.mxu0 0.0
    %1244 = vmatpush1.msra.mxu0 0.0
    %1245 = vmatprep.subr.mxu0 0.0
    %1246 = vmatpush1.msra.mxu0 0.0
    %1247 = vmatprep.subr.mxu0 0.0
    %1248 = vmatpush1.msra.mxu0 0.0
    %1249 = vmatprep.subr.mxu0 0.0
    %1250 = vmatpush1.msra.mxu0 0.0
    %1251 = vmatprep.subr.mxu0 0.0
    %1252 = vmatpush1.msra.mxu0 0.0
    %1253 = vmatprep.subr.mxu0 0.0
    %1254 = vmatpush1.msra.mxu0 0.0
    %1255 = vmatprep.subr.mxu0 0.0
    %1256 = vmatpush1.msra.mxu0 0.0
    %1257 = vmatprep.subr.mxu0 0.0
    %1258 = vmatpush1.msra.mxu0 0.0
    %1259 = vmatprep.subr.mxu0 0.0
    %1260 = vmatpush1.msra.mxu0 0.0
    %1261 = vmatprep.subr.mxu0 0.0
    %1262 = vmatpush1.msra.mxu0 0.0
    %1263 = vmatprep.subr.mxu0 0.0
    %1264 = vmatpush1.msra.mxu0 0.0
    %1265 = vmatprep.subr.mxu0 0.0
    %1266 = vmatpush1.msra.mxu0 0.0
    %1267 = vmatprep.mubr.f32.mxu0 0.0
    %1268 = vmatmul.mubr.f32.gmra.mrb[0].mxu0 %v1201
    %v1269 = vpop.f32.mrb[0].mxu0
    %v1270 = vadd.f32 0.0, %v1269
    %v1271 = vpop.f32.mrb[0].mxu0
    %1272 = vdwg.mxu0
    %v1273 = vadd.f32 %v1169, %v1270
    %v1274 = vxor.u32 %v1273, 2147483648
    %v1275 = vmul.f32 %v1274, 1.442695
    %v1276 = vpow.pop %v1275
    %v1277 = vadd.f32 %v1276, 1.0
    %v1278 = vrcp.pop %v1277
    %v1279 = vmul.f32 1.0, %v1278
    %v1280 = vtanh.pop %v1273
    %v1281 = vmul.f32 %v1279, 0.0
    %1283 = vrot.lane.b32.xlu0 %v1280, 32
    %v1284 = vpop.permute.xlu0 %1283
    %v1286 = vmul.f32 %v1279, %v1284
    %1288 = vrot.lane.b32.xlu0 %v1286, 32
    %v1289 = vpop.permute.xlu0 %1288
    %v1291 = vadd.f32 %v1281, %v1289
    %v1292 = vtanh.pop %v1291
    %1294 = vrot.lane.b32.xlu0 %v1292, 32
    %v1295 = vpop.permute.xlu0 %1294
    %v1297 = vmul.f32 %v1279, %v1295
    %1299 = vrot.lane.b32.xlu0 %v1297, 64
    %v1300 = vpop.permute.xlu0 %1299
    %v1302 = vsel %vm572, %v1300, 0.0
    %v1304 = vlaneseq
    %v1305 = vshrl.u32 %v1304, 7
    %v1306 = vsub.s32 0, %v1305
    %v1307 = vrot.slane %v1199, %v1306
    %v1310 = vsel %vm1089, %v1302, 0
    %1312 = vmatprep.subr.mxu0 0.0
    %1313 = vmatpush1.msra.mxu0 %v1191
    %1314 = vmatprep.subr.mxu0 0.0
    %1315 = vmatpush1.msra.mxu0 %v1192
    %1316 = vmatprep.subr.mxu0 0.0
    %1317 = vmatpush1.msra.mxu0 %v1193
    %1318 = vmatprep.subr.mxu0 0.0
    %1319 = vmatpush1.msra.mxu0 %v1194
    %1320 = vmatprep.subr.mxu0 0.0
    %1321 = vmatpush1.msra.mxu0 %v1195
    %1322 = vmatprep.subr.mxu0 0.0
    %1323 = vmatpush1.msra.mxu0 %v1196
    %1324 = vmatprep.subr.mxu0 0.0
    %1325 = vmatpush1.msra.mxu0 %v1197
    %1326 = vmatprep.subr.mxu0 0.0
    %1327 = vmatpush1.msra.mxu0 %v1198
    %1328 = vmatprep.subr.mxu0 0.0
    %1329 = vmatpush1.msra.mxu0 0.0
    %1330 = vmatprep.subr.mxu0 0.0
    %1331 = vmatpush1.msra.mxu0 0.0
    %1332 = vmatprep.subr.mxu0 0.0
    %1333 = vmatpush1.msra.mxu0 0.0
    %1334 = vmatprep.subr.mxu0 0.0
    %1335 = vmatpush1.msra.mxu0 0.0
    %1336 = vmatprep.subr.mxu0 0.0
    %1337 = vmatpush1.msra.mxu0 0.0
    %1338 = vmatprep.subr.mxu0 0.0
    %1339 = vmatpush1.msra.mxu0 0.0
    %1340 = vmatprep.subr.mxu0 0.0
    %1341 = vmatpush1.msra.mxu0 0.0
    %1342 = vmatprep.subr.mxu0 0.0
    %1343 = vmatpush1.msra.mxu0 0.0
    %1344 = vmatprep.subr.mxu0 0.0
    %1345 = vmatpush1.msra.mxu0 0.0
    %1346 = vmatprep.subr.mxu0 0.0
    %1347 = vmatpush1.msra.mxu0 0.0
    %1348 = vmatprep.subr.mxu0 0.0
    %1349 = vmatpush1.msra.mxu0 0.0
    %1350 = vmatprep.subr.mxu0 0.0
    %1351 = vmatpush1.msra.mxu0 0.0
    %1352 = vmatprep.subr.mxu0 0.0
    %1353 = vmatpush1.msra.mxu0 0.0
    %1354 = vmatprep.subr.mxu0 0.0
    %1355 = vmatpush1.msra.mxu0 0.0
    %1356 = vmatprep.subr.mxu0 0.0
    %1357 = vmatpush1.msra.mxu0 0.0
    %1358 = vmatprep.subr.mxu0 0.0
    %1359 = vmatpush1.msra.mxu0 0.0
    %1360 = vmatprep.subr.mxu0 0.0
    %1361 = vmatpush1.msra.mxu0 0.0
    %1362 = vmatprep.subr.mxu0 0.0
    %1363 = vmatpush1.msra.mxu0 0.0
    %1364 = vmatprep.subr.mxu0 0.0
    %1365 = vmatpush1.msra.mxu0 0.0
    %1366 = vmatprep.subr.mxu0 0.0
    %1367 = vmatpush1.msra.mxu0 0.0
    %1368 = vmatprep.subr.mxu0 0.0
    %1369 = vmatpush1.msra.mxu0 0.0
    %1370 = vmatprep.subr.mxu0 0.0
    %1371 = vmatpush1.msra.mxu0 0.0
    %1372 = vmatprep.subr.mxu0 0.0
    %1373 = vmatpush1.msra.mxu0 0.0
    %1374 = vmatprep.subr.mxu0 0.0
    %1375 = vmatpush1.msra.mxu0 0.0
    %1376 = vmatprep.mubr.f32.mxu0 0.0
    %1377 = vmatmul.mubr.f32.gmra.mrb[0].mxu0 %v1310
    %v1378 = vpop.f32.mrb[0].mxu0
    %v1379 = vadd.f32 %v1307, %v1378
    %v1380 = vpop.f32.mrb[0].mxu0
    %1381 = vdwg.mxu0
    %v1382 = vxor.u32 %v1379, 2147483648
    %v1383 = vmul.f32 %v1382, 1.442695
    %v1384 = vpow.pop %v1383
    %v1385 = vadd.f32 %v1384, 1.0
    %v1386 = vrcp.pop %v1385
    %v1387 = vmul.f32 1.0, %v1386
    %v1388 = vtanh.pop %v1379
    %v1389 = vmul.f32 %v1387, 0.0
    %1391 = vrot.lane.b32.xlu0 %v1388, 32
    %v1392 = vpop.permute.xlu0 %1391
    %v1394 = vmul.f32 %v1387, %v1392
    %1396 = vrot.lane.b32.xlu0 %v1394, 32
    %v1397 = vpop.permute.xlu0 %1396
    %v1399 = vadd.f32 %v1389, %v1397
    %v1400 = vtanh.pop %v1399
    %1402 = vrot.lane.b32.xlu0 %v1400, 32
    %v1403 = vpop.permute.xlu0 %1402
    %v1405 = vmul.f32 %v1387, %v1403
    %v1406 = vsel %vm572, %v1300, 0
    %1408 = vmatprep.subr.mxu0 0.0
    %1409 = vmatpush1.msra.mxu0 %v1187
    %1410 = vmatprep.subr.mxu0 0.0
    %1411 = vmatpush1.msra.mxu0 %v1188
    %1412 = vmatprep.subr.mxu0 0.0
    %1413 = vmatpush1.msra.mxu0 %v1189
    %1414 = vmatprep.subr.mxu0 0.0
    %1415 = vmatpush1.msra.mxu0 %v1190
    %1416 = vmatprep.subr.mxu0 0.0
    %1417 = vmatpush1.msra.mxu0 0.0
    %1418 = vmatprep.subr.mxu0 0.0
    %1419 = vmatpush1.msra.mxu0 0.0
    %1420 = vmatprep.subr.mxu0 0.0
    %1421 = vmatpush1.msra.mxu0 0.0
    %1422 = vmatprep.subr.mxu0 0.0
    %1423 = vmatpush1.msra.mxu0 0.0
    %1424 = vmatprep.subr.mxu0 0.0
    %1425 = vmatpush1.msra.mxu0 0.0
    %1426 = vmatprep.subr.mxu0 0.0
    %1427 = vmatpush1.msra.mxu0 0.0
    %1428 = vmatprep.subr.mxu0 0.0
    %1429 = vmatpush1.msra.mxu0 0.0
    %1430 = vmatprep.subr.mxu0 0.0
    %1431 = vmatpush1.msra.mxu0 0.0
    %1432 = vmatprep.subr.mxu0 0.0
    %1433 = vmatpush1.msra.mxu0 0.0
    %1434 = vmatprep.subr.mxu0 0.0
    %1435 = vmatpush1.msra.mxu0 0.0
    %1436 = vmatprep.subr.mxu0 0.0
    %1437 = vmatpush1.msra.mxu0 0.0
    %1438 = vmatprep.subr.mxu0 0.0
    %1439 = vmatpush1.msra.mxu0 0.0
    %1440 = vmatprep.subr.mxu0 0.0
    %1441 = vmatpush1.msra.mxu0 0.0
    %1442 = vmatprep.subr.mxu0 0.0
    %1443 = vmatpush1.msra.mxu0 0.0
    %1444 = vmatprep.subr.mxu0 0.0
    %1445 = vmatpush1.msra.mxu0 0.0
    %1446 = vmatprep.subr.mxu0 0.0
    %1447 = vmatpush1.msra.mxu0 0.0
    %1448 = vmatprep.subr.mxu0 0.0
    %1449 = vmatpush1.msra.mxu0 0.0
    %1450 = vmatprep.subr.mxu0 0.0
    %1451 = vmatpush1.msra.mxu0 0.0
    %1452 = vmatprep.subr.mxu0 0.0
    %1453 = vmatpush1.msra.mxu0 0.0
    %1454 = vmatprep.subr.mxu0 0.0
    %1455 = vmatpush1.msra.mxu0 0.0
    %1456 = vmatprep.subr.mxu0 0.0
    %1457 = vmatpush1.msra.mxu0 0.0
    %1458 = vmatprep.subr.mxu0 0.0
    %1459 = vmatpush1.msra.mxu0 0.0
    %1460 = vmatprep.subr.mxu0 0.0
    %1461 = vmatpush1.msra.mxu0 0.0
    %1462 = vmatprep.subr.mxu0 0.0
    %1463 = vmatpush1.msra.mxu0 0.0
    %1464 = vmatprep.subr.mxu0 0.0
    %1465 = vmatpush1.msra.mxu0 0.0
    %1466 = vmatprep.subr.mxu0 0.0
    %1467 = vmatpush1.msra.mxu0 0.0
    %1468 = vmatprep.subr.mxu0 0.0
    %1469 = vmatpush1.msra.mxu0 0.0
    %1470 = vmatprep.subr.mxu0 0.0
    %1471 = vmatpush1.msra.mxu0 0.0
    %1472 = vmatprep.mubr.f32.mxu0 0.0
    %1473 = vmatmul.mubr.f32.gmra.mrb[0].mxu0 %v1406
    %v1474 = vpop.f32.mrb[0].mxu0
    %v1475 = vadd.f32 0.0, %v1474
    %v1476 = vpop.f32.mrb[0].mxu0
    %1477 = vdwg.mxu0
    %v1478 = vadd.f32 %v1174, %v1475
    %v1479 = vxor.u32 %v1478, 2147483648
    %v1480 = vmul.f32 %v1479, 1.442695
    %v1481 = vpow.pop %v1480
    %v1482 = vadd.f32 %v1481, 1.0
    %v1483 = vrcp.pop %v1482
    %v1484 = vmul.f32 1.0, %v1483
    %v1485 = vtanh.pop %v1478
    %v1486 = vmul.f32 %v1484, %v1291
    %1488 = vrot.lane.b32.xlu0 %v1485, 32
    %v1489 = vpop.permute.xlu0 %1488
    %v1491 = vmul.f32 %v1484, %v1489
    %1493 = vrot.lane.b32.xlu0 %v1491, 32
    %v1494 = vpop.permute.xlu0 %1493
    %v1496 = vadd.f32 %v1486, %v1494
    %v1497 = vtanh.pop %v1496
    %1499 = vrot.lane.b32.xlu0 %v1497, 32
    %v1500 = vpop.permute.xlu0 %1499
    %v1502 = vmul.f32 %v1484, %v1500
    %1504 = vrot.lane.b32.xlu0 %v1502, 64
    %v1505 = vpop.permute.xlu0 %1504
    %1508 = vrot.lane.b32.xlu0 %v1405, 96
    %v1509 = vpop.permute.xlu0 %1508
    %v1511 = vsel %vm572, %v1505, %v1509
    %v1513 = vsel %vm1089, %v1511, 0
    %1515 = vmatprep.subr.mxu0 0.0
    %1516 = vmatpush1.msra.mxu0 %v1191
    %1517 = vmatprep.subr.mxu0 0.0
    %1518 = vmatpush1.msra.mxu0 %v1192
    %1519 = vmatprep.subr.mxu0 0.0
    %1520 = vmatpush1.msra.mxu0 %v1193
    %1521 = vmatprep.subr.mxu0 0.0
    %1522 = vmatpush1.msra.mxu0 %v1194
    %1523 = vmatprep.subr.mxu0 0.0
    %1524 = vmatpush1.msra.mxu0 %v1195
    %1525 = vmatprep.subr.mxu0 0.0
    %1526 = vmatpush1.msra.mxu0 %v1196
    %1527 = vmatprep.subr.mxu0 0.0
    %1528 = vmatpush1.msra.mxu0 %v1197
    %1529 = vmatprep.subr.mxu0 0.0
    %1530 = vmatpush1.msra.mxu0 %v1198
    %1531 = vmatprep.subr.mxu0 0.0
    %1532 = vmatpush1.msra.mxu0 0.0
    %1533 = vmatprep.subr.mxu0 0.0
    %1534 = vmatpush1.msra.mxu0 0.0
    %1535 = vmatprep.subr.mxu0 0.0
    %1536 = vmatpush1.msra.mxu0 0.0
    %1537 = vmatprep.subr.mxu0 0.0
    %1538 = vmatpush1.msra.mxu0 0.0
    %1539 = vmatprep.subr.mxu0 0.0
    %1540 = vmatpush1.msra.mxu0 0.0
    %1541 = vmatprep.subr.mxu0 0.0
    %1542 = vmatpush1.msra.mxu0 0.0
    %1543 = vmatprep.subr.mxu0 0.0
    %1544 = vmatpush1.msra.mxu0 0.0
    %1545 = vmatprep.subr.mxu0 0.0
    %1546 = vmatpush1.msra.mxu0 0.0
    %1547 = vmatprep.subr.mxu0 0.0
    %1548 = vmatpush1.msra.mxu0 0.0
    %1549 = vmatprep.subr.mxu0 0.0
    %1550 = vmatpush1.msra.mxu0 0.0
    %1551 = vmatprep.subr.mxu0 0.0
    %1552 = vmatpush1.msra.mxu0 0.0
    %1553 = vmatprep.subr.mxu0 0.0
    %1554 = vmatpush1.msra.mxu0 0.0
    %1555 = vmatprep.subr.mxu0 0.0
    %1556 = vmatpush1.msra.mxu0 0.0
    %1557 = vmatprep.subr.mxu0 0.0
    %1558 = vmatpush1.msra.mxu0 0.0
    %1559 = vmatprep.subr.mxu0 0.0
    %1560 = vmatpush1.msra.mxu0 0.0
    %1561 = vmatprep.subr.mxu0 0.0
    %1562 = vmatpush1.msra.mxu0 0.0
    %1563 = vmatprep.subr.mxu0 0.0
    %1564 = vmatpush1.msra.mxu0 0.0
    %1565 = vmatprep.subr.mxu0 0.0
    %1566 = vmatpush1.msra.mxu0 0.0
    %1567 = vmatprep.subr.mxu0 0.0
    %1568 = vmatpush1.msra.mxu0 0.0
    %1569 = vmatprep.subr.mxu0 0.0
    %1570 = vmatpush1.msra.mxu0 0.0
    %1571 = vmatprep.subr.mxu0 0.0
    %1572 = vmatpush1.msra.mxu0 0.0
    %1573 = vmatprep.subr.mxu0 0.0
    %1574 = vmatpush1.msra.mxu0 0.0
    %1575 = vmatprep.subr.mxu0 0.0
    %1576 = vmatpush1.msra.mxu0 0.0
    %1577 = vmatprep.subr.mxu0 0.0
    %1578 = vmatpush1.msra.mxu0 0.0
    %1579 = vmatprep.mubr.f32.mxu0 0.0
    %1580 = vmatmul.mubr.f32.gmra.mrb[0].mxu0 %v1513
    %v1581 = vpop.f32.mrb[0].mxu0
    %v1582 = vadd.f32 %v1307, %v1581
    %v1583 = vpop.f32.mrb[0].mxu0
    %1584 = vdwg.mxu0
    %v1585 = vxor.u32 %v1582, 2147483648
    %v1586 = vmul.f32 %v1585, 1.442695
    %v1587 = vpow.pop %v1586
    %v1588 = vadd.f32 %v1587, 1.0
    %v1589 = vrcp.pop %v1588
    %v1590 = vmul.f32 1.0, %v1589
    %v1591 = vtanh.pop %v1582
    %v1592 = vmul.f32 %v1590, %v1399
    %1594 = vrot.lane.b32.xlu0 %v1591, 32
    %v1595 = vpop.permute.xlu0 %1594
    %v1597 = vmul.f32 %v1590, %v1595
    %1599 = vrot.lane.b32.xlu0 %v1597, 32
    %v1600 = vpop.permute.xlu0 %1599
    %v1602 = vadd.f32 %v1592, %v1600
    %v1603 = vtanh.pop %v1602
    %1605 = vrot.lane.b32.xlu0 %v1603, 32
    %v1606 = vpop.permute.xlu0 %1605
    %v1608 = vmul.f32 %v1590, %v1606
    %v1609 = vsel %vm572, %v1505, 0
    %1611 = vmatprep.subr.mxu0 0.0
    %1612 = vmatpush1.msra.mxu0 %v1187
    %1613 = vmatprep.subr.mxu0 0.0
    %1614 = vmatpush1.msra.mxu0 %v1188
    %1615 = vmatprep.subr.mxu0 0.0
    %1616 = vmatpush1.msra.mxu0 %v1189
    %1617 = vmatprep.subr.mxu0 0.0
    %1618 = vmatpush1.msra.mxu0 %v1190
    %1619 = vmatprep.subr.mxu0 0.0
    %1620 = vmatpush1.msra.mxu0 0.0
    %1621 = vmatprep.subr.mxu0 0.0
    %1622 = vmatpush1.msra.mxu0 0.0
    %1623 = vmatprep.subr.mxu0 0.0
    %1624 = vmatpush1.msra.mxu0 0.0
    %1625 = vmatprep.subr.mxu0 0.0
    %1626 = vmatpush1.msra.mxu0 0.0
    %1627 = vmatprep.subr.mxu0 0.0
    %1628 = vmatpush1.msra.mxu0 0.0
    %1629 = vmatprep.subr.mxu0 0.0
    %1630 = vmatpush1.msra.mxu0 0.0
    %1631 = vmatprep.subr.mxu0 0.0
    %1632 = vmatpush1.msra.mxu0 0.0
    %1633 = vmatprep.subr.mxu0 0.0
    %1634 = vmatpush1.msra.mxu0 0.0
    %1635 = vmatprep.subr.mxu0 0.0
    %1636 = vmatpush1.msra.mxu0 0.0
    %1637 = vmatprep.subr.mxu0 0.0
    %1638 = vmatpush1.msra.mxu0 0.0
    %1639 = vmatprep.subr.mxu0 0.0
    %1640 = vmatpush1.msra.mxu0 0.0
    %1641 = vmatprep.subr.mxu0 0.0
    %1642 = vmatpush1.msra.mxu0 0.0
    %1643 = vmatprep.subr.mxu0 0.0
    %1644 = vmatpush1.msra.mxu0 0.0
    %1645 = vmatprep.subr.mxu0 0.0
    %1646 = vmatpush1.msra.mxu0 0.0
    %1647 = vmatprep.subr.mxu0 0.0
    %1648 = vmatpush1.msra.mxu0 0.0
    %1649 = vmatprep.subr.mxu0 0.0
    %1650 = vmatpush1.msra.mxu0 0.0
    %1651 = vmatprep.subr.mxu0 0.0
    %1652 = vmatpush1.msra.mxu0 0.0
    %1653 = vmatprep.subr.mxu0 0.0
    %1654 = vmatpush1.msra.mxu0 0.0
    %1655 = vmatprep.subr.mxu0 0.0
    %1656 = vmatpush1.msra.mxu0 0.0
    %1657 = vmatprep.subr.mxu0 0.0
    %1658 = vmatpush1.msra.mxu0 0.0
    %1659 = vmatprep.subr.mxu0 0.0
    %1660 = vmatpush1.msra.mxu0 0.0
    %1661 = vmatprep.subr.mxu0 0.0
    %1662 = vmatpush1.msra.mxu0 0.0
    %1663 = vmatprep.subr.mxu0 0.0
    %1664 = vmatpush1.msra.mxu0 0.0
    %1665 = vmatprep.subr.mxu0 0.0
    %1666 = vmatpush1.msra.mxu0 0.0
    %1667 = vmatprep.subr.mxu0 0.0
    %1668 = vmatpush1.msra.mxu0 0.0
    %1669 = vmatprep.subr.mxu0 0.0
    %1670 = vmatpush1.msra.mxu0 0.0
    %1671 = vmatprep.subr.mxu0 0.0
    %1672 = vmatpush1.msra.mxu0 0.0
    %1673 = vmatprep.subr.mxu0 0.0
    %1674 = vmatpush1.msra.mxu0 0.0
    %1675 = vmatprep.mubr.f32.mxu0 0.0
    %1676 = vmatmul.mubr.f32.gmra.mrb[0].mxu0 %v1609
    %v1677 = vpop.f32.mrb[0].mxu0
    %v1678 = vadd.f32 0.0, %v1677
    %v1679 = vpop.f32.mrb[0].mxu0
    %1680 = vdwg.mxu0
    %v1681 = vadd.f32 %v1179, %v1678
    %v1682 = vxor.u32 %v1681, 2147483648
    %v1683 = vmul.f32 %v1682, 1.442695
    %v1684 = vpow.pop %v1683
    %v1685 = vadd.f32 %v1684, 1.0
    %v1686 = vrcp.pop %v1685
    %v1687 = vmul.f32 1.0, %v1686
    %v1688 = vtanh.pop %v1681
    %v1689 = vmul.f32 %v1687, %v1496
    %1691 = vrot.lane.b32.xlu0 %v1688, 32
    %v1692 = vpop.permute.xlu0 %1691
    %v1694 = vmul.f32 %v1687, %v1692
    %1696 = vrot.lane.b32.xlu0 %v1694, 32
    %v1697 = vpop.permute.xlu0 %1696
    %v1699 = vadd.f32 %v1689, %v1697
    %v1700 = vtanh.pop %v1699
    %1702 = vrot.lane.b32.xlu0 %v1700, 32
    %v1703 = vpop.permute.xlu0 %1702
    %v1705 = vmul.f32 %v1687, %v1703
    %1707 = vrot.lane.b32.xlu0 %v1705, 64
    %v1708 = vpop.permute.xlu0 %1707
    %1711 = vrot.lane.b32.xlu0 %v1608, 96
    %v1712 = vpop.permute.xlu0 %1711
    %v1714 = vsel %vm572, %v1708, %v1712
    %v1716 = vsel %vm1089, %v1714, 0
    %1718 = vmatprep.subr.mxu0 0.0
    %1719 = vmatpush1.msra.mxu0 %v1191
    %1720 = vmatprep.subr.mxu0 0.0
    %1721 = vmatpush1.msra.mxu0 %v1192
    %1722 = vmatprep.subr.mxu0 0.0
    %1723 = vmatpush1.msra.mxu0 %v1193
    %1724 = vmatprep.subr.mxu0 0.0
    %1725 = vmatpush1.msra.mxu0 %v1194
    %1726 = vmatprep.subr.mxu0 0.0
    %1727 = vmatpush1.msra.mxu0 %v1195
    %1728 = vmatprep.subr.mxu0 0.0
    %1729 = vmatpush1.msra.mxu0 %v1196
    %1730 = vmatprep.subr.mxu0 0.0
    %1731 = vmatpush1.msra.mxu0 %v1197
    %1732 = vmatprep.subr.mxu0 0.0
    %1733 = vmatpush1.msra.mxu0 %v1198
    %1734 = vmatprep.subr.mxu0 0.0
    %1735 = vmatpush1.msra.mxu0 0.0
    %1736 = vmatprep.subr.mxu0 0.0
    %1737 = vmatpush1.msra.mxu0 0.0
    %1738 = vmatprep.subr.mxu0 0.0
    %1739 = vmatpush1.msra.mxu0 0.0
    %1740 = vmatprep.subr.mxu0 0.0
    %1741 = vmatpush1.msra.mxu0 0.0
    %1742 = vmatprep.subr.mxu0 0.0
    %1743 = vmatpush1.msra.mxu0 0.0
    %1744 = vmatprep.subr.mxu0 0.0
    %1745 = vmatpush1.msra.mxu0 0.0
    %1746 = vmatprep.subr.mxu0 0.0
    %1747 = vmatpush1.msra.mxu0 0.0
    %1748 = vmatprep.subr.mxu0 0.0
    %1749 = vmatpush1.msra.mxu0 0.0
    %1750 = vmatprep.subr.mxu0 0.0
    %1751 = vmatpush1.msra.mxu0 0.0
    %1752 = vmatprep.subr.mxu0 0.0
    %1753 = vmatpush1.msra.mxu0 0.0
    %1754 = vmatprep.subr.mxu0 0.0
    %1755 = vmatpush1.msra.mxu0 0.0
    %1756 = vmatprep.subr.mxu0 0.0
    %1757 = vmatpush1.msra.mxu0 0.0
    %1758 = vmatprep.subr.mxu0 0.0
    %1759 = vmatpush1.msra.mxu0 0.0
    %1760 = vmatprep.subr.mxu0 0.0
    %1761 = vmatpush1.msra.mxu0 0.0
    %1762 = vmatprep.subr.mxu0 0.0
    %1763 = vmatpush1.msra.mxu0 0.0
    %1764 = vmatprep.subr.mxu0 0.0
    %1765 = vmatpush1.msra.mxu0 0.0
    %1766 = vmatprep.subr.mxu0 0.0
    %1767 = vmatpush1.msra.mxu0 0.0
    %1768 = vmatprep.subr.mxu0 0.0
    %1769 = vmatpush1.msra.mxu0 0.0
    %1770 = vmatprep.subr.mxu0 0.0
    %1771 = vmatpush1.msra.mxu0 0.0
    %1772 = vmatprep.subr.mxu0 0.0
    %1773 = vmatpush1.msra.mxu0 0.0
    %1774 = vmatprep.subr.mxu0 0.0
    %1775 = vmatpush1.msra.mxu0 0.0
    %1776 = vmatprep.subr.mxu0 0.0
    %1777 = vmatpush1.msra.mxu0 0.0
    %1778 = vmatprep.subr.mxu0 0.0
    %1779 = vmatpush1.msra.mxu0 0.0
    %1780 = vmatprep.subr.mxu0 0.0
    %1781 = vmatpush1.msra.mxu0 0.0
    %1782 = vmatprep.mubr.f32.mxu0 0.0
    %1783 = vmatmul.mubr.f32.gmra.mrb[0].mxu0 %v1716
    %v1784 = vpop.f32.mrb[0].mxu0
    %v1785 = vadd.f32 %v1307, %v1784
    %v1786 = vpop.f32.mrb[0].mxu0
    %1787 = vdwg.mxu0
    %v1788 = vxor.u32 %v1785, 2147483648
    %v1789 = vmul.f32 %v1788, 1.442695
    %v1790 = vpow.pop %v1789
    %v1791 = vadd.f32 %v1790, 1.0
    %v1792 = vrcp.pop %v1791
    %v1793 = vmul.f32 1.0, %v1792
    %v1794 = vtanh.pop %v1785
    %v1795 = vmul.f32 %v1793, %v1602
    %1797 = vrot.lane.b32.xlu0 %v1794, 32
    %v1798 = vpop.permute.xlu0 %1797
    %v1800 = vmul.f32 %v1793, %v1798
    %1802 = vrot.lane.b32.xlu0 %v1800, 32
    %v1803 = vpop.permute.xlu0 %1802
    %v1805 = vadd.f32 %v1795, %v1803
    %v1806 = vtanh.pop %v1805
    %1808 = vrot.lane.b32.xlu0 %v1806, 32
    %v1809 = vpop.permute.xlu0 %1808
    %v1811 = vmul.f32 %v1793, %v1809
    %v1812 = vsel %vm572, %v1708, 0
    %1814 = vmatprep.subr.mxu0 0.0
    %1815 = vmatpush1.msra.mxu0 %v1187
    %1816 = vmatprep.subr.mxu0 0.0
    %1817 = vmatpush1.msra.mxu0 %v1188
    %1818 = vmatprep.subr.mxu0 0.0
    %1819 = vmatpush1.msra.mxu0 %v1189
    %1820 = vmatprep.subr.mxu0 0.0
    %1821 = vmatpush1.msra.mxu0 %v1190
    %1822 = vmatprep.subr.mxu0 0.0
    %1823 = vmatpush1.msra.mxu0 0.0
    %1824 = vmatprep.subr.mxu0 0.0
    %1825 = vmatpush1.msra.mxu0 0.0
    %1826 = vmatprep.subr.mxu0 0.0
    %1827 = vmatpush1.msra.mxu0 0.0
    %1828 = vmatprep.subr.mxu0 0.0
    %1829 = vmatpush1.msra.mxu0 0.0
    %1830 = vmatprep.subr.mxu0 0.0
    %1831 = vmatpush1.msra.mxu0 0.0
    %1832 = vmatprep.subr.mxu0 0.0
    %1833 = vmatpush1.msra.mxu0 0.0
    %1834 = vmatprep.subr.mxu0 0.0
    %1835 = vmatpush1.msra.mxu0 0.0
    %1836 = vmatprep.subr.mxu0 0.0
    %1837 = vmatpush1.msra.mxu0 0.0
    %1838 = vmatprep.subr.mxu0 0.0
    %1839 = vmatpush1.msra.mxu0 0.0
    %1840 = vmatprep.subr.mxu0 0.0
    %1841 = vmatpush1.msra.mxu0 0.0
    %1842 = vmatprep.subr.mxu0 0.0
    %1843 = vmatpush1.msra.mxu0 0.0
    %1844 = vmatprep.subr.mxu0 0.0
    %1845 = vmatpush1.msra.mxu0 0.0
    %1846 = vmatprep.subr.mxu0 0.0
    %1847 = vmatpush1.msra.mxu0 0.0
    %1848 = vmatprep.subr.mxu0 0.0
    %1849 = vmatpush1.msra.mxu0 0.0
    %1850 = vmatprep.subr.mxu0 0.0
    %1851 = vmatpush1.msra.mxu0 0.0
    %1852 = vmatprep.subr.mxu0 0.0
    %1853 = vmatpush1.msra.mxu0 0.0
    %1854 = vmatprep.subr.mxu0 0.0
    %1855 = vmatpush1.msra.mxu0 0.0
    %1856 = vmatprep.subr.mxu0 0.0
    %1857 = vmatpush1.msra.mxu0 0.0
    %1858 = vmatprep.subr.mxu0 0.0
    %1859 = vmatpush1.msra.mxu0 0.0
    %1860 = vmatprep.subr.mxu0 0.0
    %1861 = vmatpush1.msra.mxu0 0.0
    %1862 = vmatprep.subr.mxu0 0.0
    %1863 = vmatpush1.msra.mxu0 0.0
    %1864 = vmatprep.subr.mxu0 0.0
    %1865 = vmatpush1.msra.mxu0 0.0
    %1866 = vmatprep.subr.mxu0 0.0
    %1867 = vmatpush1.msra.mxu0 0.0
    %1868 = vmatprep.subr.mxu0 0.0
    %1869 = vmatpush1.msra.mxu0 0.0
    %1870 = vmatprep.subr.mxu0 0.0
    %1871 = vmatpush1.msra.mxu0 0.0
    %1872 = vmatprep.subr.mxu0 0.0
    %1873 = vmatpush1.msra.mxu0 0.0
    %1874 = vmatprep.subr.mxu0 0.0
    %1875 = vmatpush1.msra.mxu0 0.0
    %1876 = vmatprep.subr.mxu0 0.0
    %1877 = vmatpush1.msra.mxu0 0.0
    %1878 = vmatprep.mubr.f32.mxu0 0.0
    %1879 = vmatmul.mubr.f32.gmra.mrb[0].mxu0 %v1812
    %v1880 = vpop.f32.mrb[0].mxu0
    %v1881 = vadd.f32 0.0, %v1880
    %v1882 = vpop.f32.mrb[0].mxu0
    %1883 = vdwg.mxu0
    %v1884 = vadd.f32 %v1184, %v1881
    %v1885 = vxor.u32 %v1884, 2147483648
    %v1886 = vmul.f32 %v1885, 1.442695
    %v1887 = vpow.pop %v1886
    %v1888 = vadd.f32 %v1887, 1.0
    %v1889 = vrcp.pop %v1888
    %v1890 = vmul.f32 1.0, %v1889
    %v1891 = vtanh.pop %v1884
    %v1892 = vmul.f32 %v1890, %v1699
    %1894 = vrot.lane.b32.xlu0 %v1891, 32
    %v1895 = vpop.permute.xlu0 %1894
    %v1897 = vmul.f32 %v1890, %v1895
    %1899 = vrot.lane.b32.xlu0 %v1897, 32
    %v1900 = vpop.permute.xlu0 %1899
    %v1902 = vadd.f32 %v1892, %v1900
    %v1903 = vtanh.pop %v1902
    %1905 = vrot.lane.b32.xlu0 %v1903, 32
    %v1906 = vpop.permute.xlu0 %1905
    %v1908 = vmul.f32 %v1890, %v1906
    %1910 = vrot.lane.b32.xlu0 %v1908, 64
    %v1911 = vpop.permute.xlu0 %1910
    %1914 = vrot.lane.b32.xlu0 %v1811, 96
    %v1915 = vpop.permute.xlu0 %1914
    %v1917 = vsel %vm572, %v1911, %v1915
    %v1919 = vsel %vm1089, %v1917, 0
    %1921 = vmatprep.subr.mxu0 0.0
    %1922 = vmatpush1.msra.mxu0 %v1191
    %1923 = vmatprep.subr.mxu0 0.0
    %1924 = vmatpush1.msra.mxu0 %v1192
    %1925 = vmatprep.subr.mxu0 0.0
    %1926 = vmatpush1.msra.mxu0 %v1193
    %1927 = vmatprep.subr.mxu0 0.0
    %1928 = vmatpush1.msra.mxu0 %v1194
    %1929 = vmatprep.subr.mxu0 0.0
    %1930 = vmatpush1.msra.mxu0 %v1195
    %1931 = vmatprep.subr.mxu0 0.0
    %1932 = vmatpush1.msra.mxu0 %v1196
    %1933 = vmatprep.subr.mxu0 0.0
    %1934 = vmatpush1.msra.mxu0 %v1197
    %1935 = vmatprep.subr.mxu0 0.0
    %1936 = vmatpush1.msra.mxu0 %v1198
    %1937 = vmatprep.subr.mxu0 0.0
    %1938 = vmatpush1.msra.mxu0 0.0
    %1939 = vmatprep.subr.mxu0 0.0
    %1940 = vmatpush1.msra.mxu0 0.0
    %1941 = vmatprep.subr.mxu0 0.0
    %1942 = vmatpush1.msra.mxu0 0.0
    %1943 = vmatprep.subr.mxu0 0.0
    %1944 = vmatpush1.msra.mxu0 0.0
    %1945 = vmatprep.subr.mxu0 0.0
    %1946 = vmatpush1.msra.mxu0 0.0
    %1947 = vmatprep.subr.mxu0 0.0
    %1948 = vmatpush1.msra.mxu0 0.0
    %1949 = vmatprep.subr.mxu0 0.0
    %1950 = vmatpush1.msra.mxu0 0.0
    %1951 = vmatprep.subr.mxu0 0.0
    %1952 = vmatpush1.msra.mxu0 0.0
    %1953 = vmatprep.subr.mxu0 0.0
    %1954 = vmatpush1.msra.mxu0 0.0
    %1955 = vmatprep.subr.mxu0 0.0
    %1956 = vmatpush1.msra.mxu0 0.0
    %1957 = vmatprep.subr.mxu0 0.0
    %1958 = vmatpush1.msra.mxu0 0.0
    %1959 = vmatprep.subr.mxu0 0.0
    %1960 = vmatpush1.msra.mxu0 0.0
    %1961 = vmatprep.subr.mxu0 0.0
    %1962 = vmatpush1.msra.mxu0 0.0
    %1963 = vmatprep.subr.mxu0 0.0
    %1964 = vmatpush1.msra.mxu0 0.0
    %1965 = vmatprep.subr.mxu0 0.0
    %1966 = vmatpush1.msra.mxu0 0.0
    %1967 = vmatprep.subr.mxu0 0.0
    %1968 = vmatpush1.msra.mxu0 0.0
    %1969 = vmatprep.subr.mxu0 0.0
    %1970 = vmatpush1.msra.mxu0 0.0
    %1971 = vmatprep.subr.mxu0 0.0
    %1972 = vmatpush1.msra.mxu0 0.0
    %1973 = vmatprep.subr.mxu0 0.0
    %1974 = vmatpush1.msra.mxu0 0.0
    %1975 = vmatprep.subr.mxu0 0.0
    %1976 = vmatpush1.msra.mxu0 0.0
    %1977 = vmatprep.subr.mxu0 0.0
    %1978 = vmatpush1.msra.mxu0 0.0
    %1979 = vmatprep.subr.mxu0 0.0
    %1980 = vmatpush1.msra.mxu0 0.0
    %1981 = vmatprep.subr.mxu0 0.0
    %1982 = vmatpush1.msra.mxu0 0.0
    %1983 = vmatprep.subr.mxu0 0.0
    %1984 = vmatpush1.msra.mxu0 0.0
    %1985 = vmatprep.mubr.f32.mxu0 0.0
    %1986 = vmatmul.mubr.f32.gmra.mrb[0].mxu0 %v1919
    %v1987 = vpop.f32.mrb[0].mxu0
    %v1988 = vadd.f32 %v1307, %v1987
    %v1989 = vpop.f32.mrb[0].mxu0
    %1990 = vdwg.mxu0
    %v1991 = vxor.u32 %v1988, 2147483648
    %v1992 = vmul.f32 %v1991, 1.442695
    %v1993 = vpow.pop %v1992
    %v1994 = vadd.f32 %v1993, 1.0
    %v1995 = vrcp.pop %v1994
    %v1996 = vmul.f32 1.0, %v1995
    %v1997 = vtanh.pop %v1988
    %v1998 = vmul.f32 %v1996, %v1805
    %2000 = vrot.lane.b32.xlu0 %v1997, 32
    %v2001 = vpop.permute.xlu0 %2000
    %v2003 = vmul.f32 %v1996, %v2001
    %2005 = vrot.lane.b32.xlu0 %v2003, 32
    %v2006 = vpop.permute.xlu0 %2005
    %v2008 = vadd.f32 %v1998, %v2006
    %v2009 = vtanh.pop %v2008
    %2011 = vrot.lane.b32.xlu0 %v2009, 32
    %v2012 = vpop.permute.xlu0 %2011
    %v2014 = vmul.f32 %v1996, %v2012
    %v2015 = vld [vmem:[#allocation5] sm:$0xff]
    %2017 = vrot.lane.b32.xlu0 %v2014, 96
    %v2018 = vpop.permute.xlu0 %2017
    %2021 = vrot.lane.b32.xlu0 %v2015, 64
    %v2022 = vpop.permute.xlu0 %2021
    %v2024 = vsel %vm572, %v1911, %v2018
    %v2025 = vsel %vm1089, %v2024, %v2022
    %v2026 = vld [vmem:[%s12] sm:$0xff]
    %v2027 = vld [vmem:[%s12 + $0x8] sm:$0xff]
    %v2028 = vld [vmem:[%s12 + $0x10] sm:$0xff]
    %v2029 = vld [vmem:[%s12 + $0x18] sm:$0xff]
    %v2030 = vld [vmem:[%s12 + $0x20] sm:$0xff]
    %v2031 = vld [vmem:[%s12 + $0x28] sm:$0xff]
    %v2032 = vld [vmem:[%s12 + $0x30] sm:$0xff]
    %v2033 = vld [vmem:[%s12 + $0x38] sm:$0xff]
    %v2034 = vld [vmem:[%s12 + $0x40] sm:$0xff]
    %v2035 = vld [vmem:[%s12 + $0x48] sm:$0xff]
    %v2036 = vld [vmem:[%s13] sm:$0x1]
    %v2038 = vlaneseq
    %v2039 = vshrl.u32 %v2038, 7
    %v2040 = vsub.s32 0, %v2039
    %v2041 = vrot.slane %v2036, %v2040
    %vm2043 = vcmask 654336
    %v2045 = vsel %vm2043, %v2025, 0
    %2047 = vmatprep.subr.mxu0 0.0
    %2048 = vmatpush1.msra.mxu0 %v2026
    %2049 = vmatprep.subr.mxu0 0.0
    %2050 = vmatpush1.msra.mxu0 %v2027
    %2051 = vmatprep.subr.mxu0 0.0
    %2052 = vmatpush1.msra.mxu0 %v2028
    %2053 = vmatprep.subr.mxu0 0.0
    %2054 = vmatpush1.msra.mxu0 %v2029
    %2055 = vmatprep.subr.mxu0 0.0
    %2056 = vmatpush1.msra.mxu0 %v2030
    %2057 = vmatprep.subr.mxu0 0.0
    %2058 = vmatpush1.msra.mxu0 %v2031
    %2059 = vmatprep.subr.mxu0 0.0
    %2060 = vmatpush1.msra.mxu0 %v2032
    %2061 = vmatprep.subr.mxu0 0.0
    %2062 = vmatpush1.msra.mxu0 %v2033
    %2063 = vmatprep.subr.mxu0 0.0
    %2064 = vmatpush1.msra.mxu0 %v2034
    %2065 = vmatprep.subr.mxu0 0.0
    %2066 = vmatpush1.msra.mxu0 %v2035
    %2067 = vmatprep.subr.mxu0 0.0
    %2068 = vmatpush1.msra.mxu0 0.0
    %2069 = vmatprep.subr.mxu0 0.0
    %2070 = vmatpush1.msra.mxu0 0.0
    %2071 = vmatprep.subr.mxu0 0.0
    %2072 = vmatpush1.msra.mxu0 0.0
    %2073 = vmatprep.subr.mxu0 0.0
    %2074 = vmatpush1.msra.mxu0 0.0
    %2075 = vmatprep.subr.mxu0 0.0
    %2076 = vmatpush1.msra.mxu0 0.0
    %2077 = vmatprep.subr.mxu0 0.0
    %2078 = vmatpush1.msra.mxu0 0.0
    %2079 = vmatprep.subr.mxu0 0.0
    %2080 = vmatpush1.msra.mxu0 0.0
    %2081 = vmatprep.subr.mxu0 0.0
    %2082 = vmatpush1.msra.mxu0 0.0
    %2083 = vmatprep.subr.mxu0 0.0
    %2084 = vmatpush1.msra.mxu0 0.0
    %2085 = vmatprep.subr.mxu0 0.0
    %2086 = vmatpush1.msra.mxu0 0.0
    %2087 = vmatprep.subr.mxu0 0.0
    %2088 = vmatpush1.msra.mxu0 0.0
    %2089 = vmatprep.subr.mxu0 0.0
    %2090 = vmatpush1.msra.mxu0 0.0
    %2091 = vmatprep.subr.mxu0 0.0
    %2092 = vmatpush1.msra.mxu0 0.0
    %2093 = vmatprep.subr.mxu0 0.0
    %2094 = vmatpush1.msra.mxu0 0.0
    %2095 = vmatprep.subr.mxu0 0.0
    %2096 = vmatpush1.msra.mxu0 0.0
    %2097 = vmatprep.subr.mxu0 0.0
    %2098 = vmatpush1.msra.mxu0 0.0
    %2099 = vmatprep.subr.mxu0 0.0
    %2100 = vmatpush1.msra.mxu0 0.0
    %2101 = vmatprep.subr.mxu0 0.0
    %2102 = vmatpush1.msra.mxu0 0.0
    %2103 = vmatprep.subr.mxu0 0.0
    %2104 = vmatpush1.msra.mxu0 0.0
    %2105 = vmatprep.subr.mxu0 0.0
    %2106 = vmatpush1.msra.mxu0 0.0
    %2107 = vmatprep.subr.mxu0 0.0
    %2108 = vmatpush1.msra.mxu0 0.0
    %2109 = vmatprep.subr.mxu0 0.0
    %2110 = vmatpush1.msra.mxu0 0.0
    %2111 = vmatprep.mubr.f32.mxu0 0.0
    %2112 = vmatmul.mubr.f32.gmra.mrb[0].mxu0 %v2045
    %v2113 = vpop.f32.mrb[0].mxu0
    %v2114 = vadd.f32 %v2041, %v2113
    %v2115 = vpop.f32.mrb[0].mxu0
    %2116 = vdwg.mxu0
    %v2117 = vmax.f32 %v2114, 0.0
    %v2118 = vld [vmem:[%s14] sm:$0xff]
    %v2119 = vld [vmem:[%s14 + $0x8] sm:$0xff]
    %v2120 = vld [vmem:[%s14 + $0x10] sm:$0xff]
    %v2121 = vld [vmem:[%s14 + $0x18] sm:$0xff]
    %v2122 = vld [vmem:[%s15] sm:$0x1]
    %v2124 = vlaneseq
    %v2125 = vshrl.u32 %v2124, 7
    %v2126 = vsub.s32 0, %v2125
    %v2127 = vrot.slane %v2122, %v2126
    %v2130 = vsel %vm572, %v2117, 0
    %2132 = vmatprep.subr.mxu0 0.0
    %2133 = vmatpush1.msra.mxu0 %v2118
    %2134 = vmatprep.subr.mxu0 0.0
    %2135 = vmatpush1.msra.mxu0 %v2119
    %2136 = vmatprep.subr.mxu0 0.0
    %2137 = vmatpush1.msra.mxu0 %v2120
    %2138 = vmatprep.subr.mxu0 0.0
    %2139 = vmatpush1.msra.mxu0 %v2121
    %2140 = vmatprep.subr.mxu0 0.0
    %2141 = vmatpush1.msra.mxu0 0.0
    %2142 = vmatprep.subr.mxu0 0.0
    %2143 = vmatpush1.msra.mxu0 0.0
    %2144 = vmatprep.subr.mxu0 0.0
    %2145 = vmatpush1.msra.mxu0 0.0
    %2146 = vmatprep.subr.mxu0 0.0
    %2147 = vmatpush1.msra.mxu0 0.0
    %2148 = vmatprep.subr.mxu0 0.0
    %2149 = vmatpush1.msra.mxu0 0.0
    %2150 = vmatprep.subr.mxu0 0.0
    %2151 = vmatpush1.msra.mxu0 0.0
    %2152 = vmatprep.subr.mxu0 0.0
    %2153 = vmatpush1.msra.mxu0 0.0
    %2154 = vmatprep.subr.mxu0 0.0
    %2155 = vmatpush1.msra.mxu0 0.0
    %2156 = vmatprep.subr.mxu0 0.0
    %2157 = vmatpush1.msra.mxu0 0.0
    %2158 = vmatprep.subr.mxu0 0.0
    %2159 = vmatpush1.msra.mxu0 0.0
    %2160 = vmatprep.subr.mxu0 0.0
    %2161 = vmatpush1.msra.mxu0 0.0
    %2162 = vmatprep.subr.mxu0 0.0
    %2163 = vmatpush1.msra.mxu0 0.0
    %2164 = vmatprep.subr.mxu0 0.0
    %2165 = vmatpush1.msra.mxu0 0.0
    %2166 = vmatprep.subr.mxu0 0.0
    %2167 = vmatpush1.msra.mxu0 0.0
    %2168 = vmatprep.subr.mxu0 0.0
    %2169 = vmatpush1.msra.mxu0 0.0
    %2170 = vmatprep.subr.mxu0 0.0
    %2171 = vmatpush1.msra.mxu0 0.0
    %2172 = vmatprep.subr.mxu0 0.0
    %2173 = vmatpush1.msra.mxu0 0.0
    %2174 = vmatprep.subr.mxu0 0.0
    %2175 = vmatpush1.msra.mxu0 0.0
    %2176 = vmatprep.subr.mxu0 0.0
    %2177 = vmatpush1.msra.mxu0 0.0
    %2178 = vmatprep.subr.mxu0 0.0
    %2179 = vmatpush1.msra.mxu0 0.0
    %2180 = vmatprep.subr.mxu0 0.0
    %2181 = vmatpush1.msra.mxu0 0.0
    %2182 = vmatprep.subr.mxu0 0.0
    %2183 = vmatpush1.msra.mxu0 0.0
    %2184 = vmatprep.subr.mxu0 0.0
    %2185 = vmatpush1.msra.mxu0 0.0
    %2186 = vmatprep.subr.mxu0 0.0
    %2187 = vmatpush1.msra.mxu0 0.0
    %2188 = vmatprep.subr.mxu0 0.0
    %2189 = vmatpush1.msra.mxu0 0.0
    %2190 = vmatprep.subr.mxu0 0.0
    %2191 = vmatpush1.msra.mxu0 0.0
    %2192 = vmatprep.subr.mxu0 0.0
    %2193 = vmatpush1.msra.mxu0 0.0
    %2194 = vmatprep.subr.mxu0 0.0
    %2195 = vmatpush1.msra.mxu0 0.0
    %2196 = vmatprep.mubr.f32.mxu0 0.0
    %2197 = vmatmul.mubr.f32.gmra.mrb[0].mxu0 %v2130
    %v2198 = vpop.f32.mrb[0].mxu0
    %v2199 = vadd.f32 %v2127, %v2198
    %v2200 = vpop.f32.mrb[0].mxu0
    %2201 = vdwg.mxu0
    %v2202 = vmax.f32 %v2199, 0.0
    %2203 = vst [vmem:[#allocation16] sm:$0xff] %v2202
    // Predicated region
    $region98: #{tpu_custom_call.1} parent=1 // pred_check
      _
    $region99: #{tpu_custom_call.1} parent=1 // pred_check_branch
      %2205 = sbr.rel (0) target = $region101
    $region100: #{tpu_custom_call.1} parent=1 // pred_region
      %s2207 = ssub.s32 128, 128
      %2208 = vsyncadd [#allocation4], %s2207
      %s2210 = sshll.u32 [#allocation16], 4
      %s2211 = int_to_ptr.vmem [resolvable:$true] %s2210
      %2213 = dma.vmem_to_hbm [thread:$0]  %s2211, 128, %s16, [#allocation4]
    $region101: #{tpu_custom_call.1} parent=1 // pred_fallthru
      _
    // Predicated region
    $region102: #{tpu_custom_call.1} parent=1 // pred_check
      _
    $region103: #{tpu_custom_call.1} parent=1 // pred_check_branch
      %2215 = sbr.rel (0) target = $region105
    $region104: #{tpu_custom_call.1} parent=1 // pred_region
      %2216 = dma.done [#allocation4], 128
    $region105: #{tpu_custom_call.1} parent=1 // pred_fallthru
      _
    %2217 = vsyncpa [#allocation3], 1
    %2218 = vsyncpa [#allocation6], 1
    %2219 = vsyncpa [#allocation9], 1
    %2220 = vsyncpa [#allocation12], 1
    %2221 = vsyncpa [#allocation15], 1
    %2222 = vsyncpa [#allocation4], 1

</llo_original>
